<compile_context>
chip_gen: v5e
topology: v5e:2x2
jax: 0.10.0
libtpu: 0.0.40
codegen_flags: <defaults>
</compile_context>

<pallas_src>
import functools

import jax
import jax.numpy as jnp
import numpy as np
from jax.experimental import pallas as pl
from jax.experimental.pallas import tpu as pltpu


def _round_up(v, m):
    return (v + m - 1) // m * m


# ------------------------------ Pallas kernels ------------------------------

def _relu_deconv_kernel(x_ref, w_ref, cmask_ref, y_ref, sum_ref, ssq_ref, *, H, W, Wp):
    """Fused ReLU + ConvTranspose2d(k=4, s=2, p=1) for one image.

    x_ref    : (Cin, Lin)        bf16  padded image, spatially flattened (row stride Wp)
    w_ref    : (4, 4, Cout, Cin) bf16  per (output-parity, tap) weight matrices
    cmask_ref: (1, L)            f32   1.0 on valid output columns, 0.0 on junk columns
    y_ref    : (4, Cout, L)      f32   per-parity channel-major output (L = H*Wp, lanes)
    sum_ref, ssq_ref : (Cout, 1) f32   per-channel partial sums for BatchNorm stats
    """
    L = H * Wp
    n_cout = y_ref.shape[1]
    cmask = cmask_ref[...]                                   # (1, L)
    s_acc = jnp.zeros((n_cout, 1), jnp.float32)
    q_acc = jnp.zeros((n_cout, 1), jnp.float32)

    for a in (0, 1):                                         # output row parity
        for b in (0, 1):                                     # output col parity
            p = a * 2 + b
            acc = jnp.zeros((n_cout, L), jnp.float32)
            for ty, sy in enumerate((1 + a, a)):             # padded row offset per tap
                for tx, sx in enumerate((1 + b, b)):         # padded col offset per tap
                    t = ty * 2 + tx
                    start = sy * Wp + sx                     # static offset in flat slab
                    xs = jnp.maximum(x_ref[:, start:start + L], 0.0)   # fused ReLU (bf16)
                    acc += jnp.dot(w_ref[p, t], xs,
                                   preferred_element_type=jnp.float32)
            y_ref[p] = acc
            accv = acc * cmask                               # exclude junk cols from stats
            s_acc += jnp.sum(accv, axis=1, keepdims=True)
            q_acc += jnp.sum(accv * acc, axis=1, keepdims=True)

    sum_ref[...] = s_acc
    ssq_ref[...] = q_acc


def _bn_dropout_kernel(*refs, apply_dropout):
    """BatchNorm2d normalize (precomputed per-channel scale/shift) + optional Dropout."""
    if apply_dropout:
        y_ref, scale_ref, shift_ref, mask_ref, o_ref = refs
    else:
        y_ref, scale_ref, shift_ref, o_ref = refs
    out = y_ref[...] * scale_ref[...] + shift_ref[...]        # (4, Cout, L), lane-dense
    if apply_dropout:
        out = out * mask_ref[...].astype(jnp.float32)         # mask is {0, 2} (p=0.5)
    o_ref[...] = out


# ------------------------------- JAX wrapper ---------------------------------

def _build_weight_mats(weight):
    """(Cin, Cout, 4, 4) ConvTranspose2d weight -> (4 parities, 4 taps, Cout, Cin)."""
    mats = []
    for a in (0, 1):
        kys = (1, 3) if a == 0 else (0, 2)
        for b in (0, 1):
            kxs = (1, 3) if b == 0 else (0, 2)
            taps = [weight[:, :, ky, kx].T for ky in kys for kx in kxs]   # (Cout, Cin)
            mats.append(jnp.stack(taps, axis=0))                          # (4, Cout, Cin)
    return jnp.stack(mats, axis=0)                                        # (4, 4, Cout, Cin)


def up_block_forward(x, weight, gamma, beta, *, seed=0, apply_dropout=True, eps=1e-5):
    """UpBlock forward.  x: (N, Cin, H, W) f32  ->  (N, Cout, 2H, 2W) f32."""
    N, Cin, H, W = x.shape
    Cout = weight.shape[1]
    Hp, Wp = H + 2, W + 2
    L = H * Wp                                 # per-parity lane length (keeps 2 junk cols/row)
    Lin = _round_up(Hp * Wp + 2, 128)          # flat input padded so every tap slice fits

    # Host-side prep (cheap, ~1x input bytes): pad + flatten + cast to bf16.
    xpad = jnp.pad(x.astype(jnp.float32), ((0, 0), (0, 0), (1, 1), (1, 1)))
    xflat = xpad.reshape(N, Cin, Hp * Wp)
    xflat = jnp.pad(xflat, ((0, 0), (0, 0), (0, Lin - Hp * Wp))).astype(jnp.bfloat16)
    wmats = _build_weight_mats(weight.astype(jnp.float32)).astype(jnp.bfloat16)
    col_mask = jnp.asarray((np.arange(L) % Wp < W).astype(np.float32)[None, :])

    # --- kernel 1: fused ReLU + transposed conv, lane-dense channel-major output,
    #     plus per-channel sum / sum-of-squares for BatchNorm ---
    kern1 = functools.partial(_relu_deconv_kernel, H=H, W=W, Wp=Wp)
    y, psum, pssq = pl.pallas_call(
        kern1,
        out_shape=(jax.ShapeDtypeStruct((N, 4, Cout, L), jnp.float32),
                   jax.ShapeDtypeStruct((N, Cout, 1), jnp.float32),
                   jax.ShapeDtypeStruct((N, Cout, 1), jnp.float32)),
        grid=(N,),
        in_specs=[pl.BlockSpec((None, Cin, Lin), lambda n: (n, 0, 0)),
                  pl.BlockSpec((4, 4, Cout, Cin), lambda n: (0, 0, 0, 0)),
                  pl.BlockSpec((1, L), lambda n: (0, 0))],
        out_specs=[pl.BlockSpec((None, 4, Cout, L), lambda n: (n, 0, 0, 0)),
                   pl.BlockSpec((None, Cout, 1), lambda n: (n, 0, 0)),
                   pl.BlockSpec((None, Cout, 1), lambda n: (n, 0, 0))],
        compiler_params=pltpu.CompilerParams(
            dimension_semantics=("parallel",),
            vmem_limit_bytes=32 * 1024 * 1024),
    )(xflat, wmats, col_mask)

    # Tiny per-channel finalize (Cout elements) of the training-mode batch statistics.
    # TODO(synk): BatchNorm2d running_mean/running_var momentum buffers are not updated.
    count = float(N * 4 * H * W)                       # = N * (2H) * (2W) pixels / channel
    ch_sum = jnp.sum(psum, axis=0)                     # (Cout, 1)
    ch_ssq = jnp.sum(pssq, axis=0)                     # (Cout, 1)
    mean = ch_sum / count
    var = ch_ssq / count - mean * mean                 # biased variance (training BN)
    scale = gamma.astype(jnp.float32).reshape(Cout, 1) * jax.lax.rsqrt(var + eps)
    shift = beta.astype(jnp.float32).reshape(Cout, 1) - mean * scale

    # --- kernel 2: normalize + dropout, same lane-dense channel-major layout ---
    kern2 = functools.partial(_bn_dropout_kernel, apply_dropout=apply_dropout)
    in_specs = [pl.BlockSpec((None, 4, Cout, L), lambda n: (n, 0, 0, 0)),
                pl.BlockSpec((Cout, 1), lambda n: (0, 0)),
                pl.BlockSpec((Cout, 1), lambda n: (0, 0))]
    args = [y, scale, shift]
    if apply_dropout:
        # nn.Dropout(0.5) training semantics: zero w.p. 0.5, scale survivors by 2.
        # TODO(synk): PyTorch's dropout RNG stream cannot be reproduced; the mask is drawn
        # with jax.random on the host (in-kernel pltpu.prng_* does not lower in interpret
        # mode) and passed as a bf16 {0, 2} scale tensor.
        keep = jax.random.bernoulli(jax.random.PRNGKey(seed), 0.5, (N, 4, Cout, L))
        args.append(keep.astype(jnp.bfloat16) * 2.0)
        in_specs.append(pl.BlockSpec((None, 4, Cout, L), lambda n: (n, 0, 0, 0)))

    ybn = pl.pallas_call(
        kern2,
        out_shape=jax.ShapeDtypeStruct((N, 4, Cout, L), jnp.float32),
        grid=(N,),
        in_specs=in_specs,
        out_specs=pl.BlockSpec((None, 4, Cout, L), lambda n: (n, 0, 0, 0)),
        compiler_params=pltpu.CompilerParams(
            dimension_semantics=("parallel",),
            vmem_limit_bytes=32 * 1024 * 1024),
    )(*args)

    # The single unavoidable relayout: scatter parities back to NCHW and strip junk cols.
    y6 = ybn.reshape(N, 2, 2, Cout, H, Wp)[..., :W]            # (N, a, b, Cout, H, W)
    return y6.transpose(0, 3, 4, 1, 5, 2).reshape(N, Cout, 2 * H, 2 * W)


# -------------------------- pure-JAX reference ------------------------------

def _reference_no_dropout(x, weight, gamma, beta, eps=1e-5):
    xr = jnp.maximum(x, 0.0)
    # transposed conv == dilated conv with flipped kernel
    rhs = jnp.flip(weight, (2, 3)).transpose(1, 0, 2, 3)        # (Cout, Cin, 4, 4)
    y = jax.lax.conv_general_dilated(
        xr, rhs, window_strides=(1, 1), padding=((2, 2), (2, 2)),
        lhs_dilation=(2, 2), dimension_numbers=('NCHW', 'OIHW', 'NCHW'),
        precision=jax.lax.Precision.HIGHEST)
    mean = y.mean(axis=(0, 2, 3), keepdims=True)
    var = ((y - mean) ** 2).mean(axis=(0, 2, 3), keepdims=True)
    return ((y - mean) / jnp.sqrt(var + eps) * gamma.reshape(1, -1, 1, 1)
            + beta.reshape(1, -1, 1, 1))


# --------------------------------- main --------------------------------------

if __name__ == "__main__":
    key = jax.random.PRNGKey(0)
    k1, k2 = jax.random.split(key)

    N, Cin, Cout, H, W = 2, 4, 8, 16, 16
    x = jax.random.normal(k1, (N, Cin, H, W), dtype=jnp.float32)

    # ConvTranspose2d weight: (in_ch, out_ch, kH, kW)
    bound = 1.0 / np.sqrt(Cin * 4 * 4)
    weight = jax.random.uniform(k2, (Cin, Cout, 4, 4), dtype=jnp.float32,
                                minval=-bound, maxval=bound)
    gamma = jnp.ones((Cout,), jnp.float32)     # BatchNorm2d default weight
    beta = jnp.zeros((Cout,), jnp.float32)     # BatchNorm2d default bias

    # Sanity check (dropout disabled so it is deterministic).  Tolerance is set for the
    # bf16-input / f32-accumulate matmul; BN division by the batch std amplifies the
    # relative bf16 rounding error.
    out_nd = up_block_forward(x, weight, gamma, beta, apply_dropout=False)
    ref = _reference_no_dropout(x, weight, gamma, beta)
    np.testing.assert_allclose(np.asarray(out_nd), np.asarray(ref),
                               atol=2e-2, rtol=2e-2)

    # Full UpBlock (middle block -> includes Dropout(0.5), training semantics).
    out = up_block_forward(x, weight, gamma, beta, seed=0, apply_dropout=True)
    jax.block_until_ready(out)
    assert out.shape == (N, Cout, 2 * H, 2 * W)
    print("KERNEL_OK")
</pallas_src>

<mosaic_0001>
module attributes {stable_mosaic.version = 11 : i64} {
  func.func @_relu_deconv_kernel(%arg0: i32, %arg1: memref<1x4x384xbf16, #tpu.memory_space<vmem>>, %arg2: memref<4x4x8x4xbf16, #tpu.memory_space<vmem>>, %arg3: memref<1x288xf32, #tpu.memory_space<vmem>>, %arg4: memref<1x4x8x288xf32, #tpu.memory_space<vmem>>, %arg5: memref<1x8x1xf32, #tpu.memory_space<vmem>>, %arg6: memref<1x8x1xf32, #tpu.memory_space<vmem>>) attributes {dimension_semantics = [#tpu.dimension_semantics<parallel>], iteration_bounds = array<i64: 2>, scalar_prefetch = 0 : i64, scratch_operands = 0 : i64, tpu.core_type = #tpu.core_type<tc>, window_params = [{transform_indices = @transform_0, window_bounds = array<i64: 1, 4, 384>}, {pipeline_mode = #tpu.pipeline_mode<synchronous>, transform_indices = @transform_1, window_bounds = array<i64: 4, 4, 8, 4>}, {pipeline_mode = #tpu.pipeline_mode<synchronous>, transform_indices = @transform_2, window_bounds = array<i64: 1, 288>}, {transform_indices = @transform_3, window_bounds = array<i64: 1, 4, 8, 288>}, {transform_indices = @transform_4, window_bounds = array<i64: 1, 8, 1>}, {transform_indices = @transform_5, window_bounds = array<i64: 1, 8, 1>}]} {
    %c0 = arith.constant 0 : index
    %c0_0 = arith.constant 0 : index
    %0 = vector.load %arg3[%c0, %c0_0] : memref<1x288xf32, #tpu.memory_space<vmem>>, vector<1x288xf32>
    %cst = arith.constant 0.000000e+00 : f32
    %1 = vector.broadcast %cst : f32 to vector<8x1xf32>
    %cst_1 = arith.constant 0.000000e+00 : f32
    %2 = vector.broadcast %cst_1 : f32 to vector<8x1xf32>
    %cst_2 = arith.constant 0.000000e+00 : f32
    %3 = vector.broadcast %cst_2 : f32 to vector<8x288xf32>
    %c0_3 = arith.constant 0 : index
    %c0_4 = arith.constant 0 : index
    %c19 = arith.constant 19 : index
    %4 = vector.load %arg1[%c0_3, %c0_4, %c19] : memref<1x4x384xbf16, #tpu.memory_space<vmem>>, vector<1x4x288xbf16>
    %5 = vector.shape_cast %4 : vector<1x4x288xbf16> to vector<4x288xbf16>
    %cst_5 = arith.constant 0.000000e+00 : bf16
    %6 = vector.broadcast %cst_5 : bf16 to vector<4x288xbf16>
    %7 = arith.maximumf %5, %6 : vector<4x288xbf16>
    %c0_6 = arith.constant 0 : index
    %c0_7 = arith.constant 0 : index
    %c0_8 = arith.constant 0 : index
    %c0_9 = arith.constant 0 : index
    %8 = vector.load %arg2[%c0_6, %c0_7, %c0_8, %c0_9] : memref<4x4x8x4xbf16, #tpu.memory_space<vmem>>, vector<1x1x8x4xbf16>
    %9 = vector.shape_cast %8 : vector<1x1x8x4xbf16> to vector<8x4xbf16>
    %cst_10 = arith.constant dense<0.000000e+00> : vector<8x288xf32>
    %10 = tpu.matmul %9, %7, %cst_10 {dimension_numbers = #tpu.dot_dimension_numbers<[1], [0], [0], [1], [0, 0, 1, 1], [], []>} : vector<8x4xbf16>, vector<4x288xbf16>, vector<8x288xf32> -> vector<8x288xf32>
    %11 = arith.addf %3, %10 : vector<8x288xf32>
    %c0_11 = arith.constant 0 : index
    %c0_12 = arith.constant 0 : index
    %c18 = arith.constant 18 : index
    %12 = vector.load %arg1[%c0_11, %c0_12, %c18] : memref<1x4x384xbf16, #tpu.memory_space<vmem>>, vector<1x4x288xbf16>
    %13 = vector.shape_cast %12 : vector<1x4x288xbf16> to vector<4x288xbf16>
    %cst_13 = arith.constant 0.000000e+00 : bf16
    %14 = vector.broadcast %cst_13 : bf16 to vector<4x288xbf16>
    %15 = arith.maximumf %13, %14 : vector<4x288xbf16>
    %c0_14 = arith.constant 0 : index
    %c1 = arith.constant 1 : index
    %c0_15 = arith.constant 0 : index
    %c0_16 = arith.constant 0 : index
    %16 = vector.load %arg2[%c0_14, %c1, %c0_15, %c0_16] : memref<4x4x8x4xbf16, #tpu.memory_space<vmem>>, vector<1x1x8x4xbf16>
    %17 = vector.shape_cast %16 : vector<1x1x8x4xbf16> to vector<8x4xbf16>
    %cst_17 = arith.constant dense<0.000000e+00> : vector<8x288xf32>
    %18 = tpu.matmul %17, %15, %cst_17 {dimension_numbers = #tpu.dot_dimension_numbers<[1], [0], [0], [1], [0, 0, 1, 1], [], []>} : vector<8x4xbf16>, vector<4x288xbf16>, vector<8x288xf32> -> vector<8x288xf32>
    %19 = arith.addf %11, %18 : vector<8x288xf32>
    %c0_18 = arith.constant 0 : index
    %c0_19 = arith.constant 0 : index
    %c1_20 = arith.constant 1 : index
    %20 = vector.load %arg1[%c0_18, %c0_19, %c1_20] : memref<1x4x384xbf16, #tpu.memory_space<vmem>>, vector<1x4x288xbf16>
    %21 = vector.shape_cast %20 : vector<1x4x288xbf16> to vector<4x288xbf16>
    %cst_21 = arith.constant 0.000000e+00 : bf16
    %22 = vector.broadcast %cst_21 : bf16 to vector<4x288xbf16>
    %23 = arith.maximumf %21, %22 : vector<4x288xbf16>
    %c0_22 = arith.constant 0 : index
    %c2 = arith.constant 2 : index
    %c0_23 = arith.constant 0 : index
    %c0_24 = arith.constant 0 : index
    %24 = vector.load %arg2[%c0_22, %c2, %c0_23, %c0_24] : memref<4x4x8x4xbf16, #tpu.memory_space<vmem>>, vector<1x1x8x4xbf16>
    %25 = vector.shape_cast %24 : vector<1x1x8x4xbf16> to vector<8x4xbf16>
    %cst_25 = arith.constant dense<0.000000e+00> : vector<8x288xf32>
    %26 = tpu.matmul %25, %23, %cst_25 {dimension_numbers = #tpu.dot_dimension_numbers<[1], [0], [0], [1], [0, 0, 1, 1], [], []>} : vector<8x4xbf16>, vector<4x288xbf16>, vector<8x288xf32> -> vector<8x288xf32>
    %27 = arith.addf %19, %26 : vector<8x288xf32>
    %c0_26 = arith.constant 0 : index
    %c0_27 = arith.constant 0 : index
    %c0_28 = arith.constant 0 : index
    %28 = vector.load %arg1[%c0_26, %c0_27, %c0_28] : memref<1x4x384xbf16, #tpu.memory_space<vmem>>, vector<1x4x288xbf16>
    %29 = vector.shape_cast %28 : vector<1x4x288xbf16> to vector<4x288xbf16>
    %cst_29 = arith.constant 0.000000e+00 : bf16
    %30 = vector.broadcast %cst_29 : bf16 to vector<4x288xbf16>
    %31 = arith.maximumf %29, %30 : vector<4x288xbf16>
    %c0_30 = arith.constant 0 : index
    %c3 = arith.constant 3 : index
    %c0_31 = arith.constant 0 : index
    %c0_32 = arith.constant 0 : index
    %32 = vector.load %arg2[%c0_30, %c3, %c0_31, %c0_32] : memref<4x4x8x4xbf16, #tpu.memory_space<vmem>>, vector<1x1x8x4xbf16>
    %33 = vector.shape_cast %32 : vector<1x1x8x4xbf16> to vector<8x4xbf16>
    %cst_33 = arith.constant dense<0.000000e+00> : vector<8x288xf32>
    %34 = tpu.matmul %33, %31, %cst_33 {dimension_numbers = #tpu.dot_dimension_numbers<[1], [0], [0], [1], [0, 0, 1, 1], [], []>} : vector<8x4xbf16>, vector<4x288xbf16>, vector<8x288xf32> -> vector<8x288xf32>
    %35 = arith.addf %27, %34 : vector<8x288xf32>
    %c0_34 = arith.constant 0 : index
    %c0_35 = arith.constant 0 : index
    %c0_36 = arith.constant 0 : index
    %c0_37 = arith.constant 0 : index
    %36 = vector.load %arg4[%c0_34, %c0_35, %c0_36, %c0_37] : memref<1x4x8x288xf32, #tpu.memory_space<vmem>>, vector<1x1x8x288xf32>
    %37 = vector.shape_cast %36 : vector<1x1x8x288xf32> to vector<8x288xf32>
    %38 = vector.shape_cast %35 : vector<8x288xf32> to vector<1x1x8x288xf32>
    tpu.vector_store %arg4[%c0_34, %c0_35, %c0_36, %c0_37], %38 {strides = array<i32>} : memref<1x4x8x288xf32, #tpu.memory_space<vmem>>, vector<1x1x8x288xf32>,
    %39 = vector.broadcast %0 : vector<1x288xf32> to vector<8x288xf32>
    %40 = arith.mulf %35, %39 : vector<8x288xf32>
    %cst_38 = arith.constant dense<0.000000e+00> : vector<8xf32>
    %41 = vector.multi_reduction <add>, %40, %cst_38 [1] : vector<8x288xf32> to vector<8xf32>
    %42 = vector.shape_cast %41 : vector<8xf32> to vector<8x1xf32>
    %43 = arith.addf %1, %42 : vector<8x1xf32>
    %44 = arith.mulf %40, %35 : vector<8x288xf32>
    %cst_39 = arith.constant dense<0.000000e+00> : vector<8xf32>
    %45 = vector.multi_reduction <add>, %44, %cst_39 [1] : vector<8x288xf32> to vector<8xf32>
    %46 = vector.shape_cast %45 : vector<8xf32> to vector<8x1xf32>
    %47 = arith.addf %2, %46 : vector<8x1xf32>
    %cst_40 = arith.constant 0.000000e+00 : f32
    %48 = vector.broadcast %cst_40 : f32 to vector<8x288xf32>
    %c0_41 = arith.constant 0 : index
    %c0_42 = arith.constant 0 : index
    %c20 = arith.constant 20 : index
    %49 = vector.load %arg1[%c0_41, %c0_42, %c20] : memref<1x4x384xbf16, #tpu.memory_space<vmem>>, vector<1x4x288xbf16>
    %50 = vector.shape_cast %49 : vector<1x4x288xbf16> to vector<4x288xbf16>
    %cst_43 = arith.constant 0.000000e+00 : bf16
    %51 = vector.broadcast %cst_43 : bf16 to vector<4x288xbf16>
    %52 = arith.maximumf %50, %51 : vector<4x288xbf16>
    %c1_44 = arith.constant 1 : index
    %c0_45 = arith.constant 0 : index
    %c0_46 = arith.constant 0 : index
    %c0_47 = arith.constant 0 : index
    %53 = vector.load %arg2[%c1_44, %c0_45, %c0_46, %c0_47] : memref<4x4x8x4xbf16, #tpu.memory_space<vmem>>, vector<1x1x8x4xbf16>
    %54 = vector.shape_cast %53 : vector<1x1x8x4xbf16> to vector<8x4xbf16>
    %cst_48 = arith.constant dense<0.000000e+00> : vector<8x288xf32>
    %55 = tpu.matmul %54, %52, %cst_48 {dimension_numbers = #tpu.dot_dimension_numbers<[1], [0], [0], [1], [0, 0, 1, 1], [], []>} : vector<8x4xbf16>, vector<4x288xbf16>, vector<8x288xf32> -> vector<8x288xf32>
    %56 = arith.addf %48, %55 : vector<8x288xf32>
    %c0_49 = arith.constant 0 : index
    %c0_50 = arith.constant 0 : index
    %c19_51 = arith.constant 19 : index
    %57 = vector.load %arg1[%c0_49, %c0_50, %c19_51] : memref<1x4x384xbf16, #tpu.memory_space<vmem>>, vector<1x4x288xbf16>
    %58 = vector.shape_cast %57 : vector<1x4x288xbf16> to vector<4x288xbf16>
    %cst_52 = arith.constant 0.000000e+00 : bf16
    %59 = vector.broadcast %cst_52 : bf16 to vector<4x288xbf16>
    %60 = arith.maximumf %58, %59 : vector<4x288xbf16>
    %c1_53 = arith.constant 1 : index
    %c1_54 = arith.constant 1 : index
    %c0_55 = arith.constant 0 : index
    %c0_56 = arith.constant 0 : index
    %61 = vector.load %arg2[%c1_53, %c1_54, %c0_55, %c0_56] : memref<4x4x8x4xbf16, #tpu.memory_space<vmem>>, vector<1x1x8x4xbf16>
    %62 = vector.shape_cast %61 : vector<1x1x8x4xbf16> to vector<8x4xbf16>
    %cst_57 = arith.constant dense<0.000000e+00> : vector<8x288xf32>
    %63 = tpu.matmul %62, %60, %cst_57 {dimension_numbers = #tpu.dot_dimension_numbers<[1], [0], [0], [1], [0, 0, 1, 1], [], []>} : vector<8x4xbf16>, vector<4x288xbf16>, vector<8x288xf32> -> vector<8x288xf32>
    %64 = arith.addf %56, %63 : vector<8x288xf32>
    %c0_58 = arith.constant 0 : index
    %c0_59 = arith.constant 0 : index
    %c2_60 = arith.constant 2 : index
    %65 = vector.load %arg1[%c0_58, %c0_59, %c2_60] : memref<1x4x384xbf16, #tpu.memory_space<vmem>>, vector<1x4x288xbf16>
    %66 = vector.shape_cast %65 : vector<1x4x288xbf16> to vector<4x288xbf16>
    %cst_61 = arith.constant 0.000000e+00 : bf16
    %67 = vector.broadcast %cst_61 : bf16 to vector<4x288xbf16>
    %68 = arith.maximumf %66, %67 : vector<4x288xbf16>
    %c1_62 = arith.constant 1 : index
    %c2_63 = arith.constant 2 : index
    %c0_64 = arith.constant 0 : index
    %c0_65 = arith.constant 0 : index
    %69 = vector.load %arg2[%c1_62, %c2_63, %c0_64, %c0_65] : memref<4x4x8x4xbf16, #tpu.memory_space<vmem>>, vector<1x1x8x4xbf16>
    %70 = vector.shape_cast %69 : vector<1x1x8x4xbf16> to vector<8x4xbf16>
    %cst_66 = arith.constant dense<0.000000e+00> : vector<8x288xf32>
    %71 = tpu.matmul %70, %68, %cst_66 {dimension_numbers = #tpu.dot_dimension_numbers<[1], [0], [0], [1], [0, 0, 1, 1], [], []>} : vector<8x4xbf16>, vector<4x288xbf16>, vector<8x288xf32> -> vector<8x288xf32>
    %72 = arith.addf %64, %71 : vector<8x288xf32>
    %c0_67 = arith.constant 0 : index
    %c0_68 = arith.constant 0 : index
    %c1_69 = arith.constant 1 : index
    %73 = vector.load %arg1[%c0_67, %c0_68, %c1_69] : memref<1x4x384xbf16, #tpu.memory_space<vmem>>, vector<1x4x288xbf16>
    %74 = vector.shape_cast %73 : vector<1x4x288xbf16> to vector<4x288xbf16>
    %cst_70 = arith.constant 0.000000e+00 : bf16
    %75 = vector.broadcast %cst_70 : bf16 to vector<4x288xbf16>
    %76 = arith.maximumf %74, %75 : vector<4x288xbf16>
    %c1_71 = arith.constant 1 : index
    %c3_72 = arith.constant 3 : index
    %c0_73 = arith.constant 0 : index
    %c0_74 = arith.constant 0 : index
    %77 = vector.load %arg2[%c1_71, %c3_72, %c0_73, %c0_74] : memref<4x4x8x4xbf16, #tpu.memory_space<vmem>>, vector<1x1x8x4xbf16>
    %78 = vector.shape_cast %77 : vector<1x1x8x4xbf16> to vector<8x4xbf16>
    %cst_75 = arith.constant dense<0.000000e+00> : vector<8x288xf32>
    %79 = tpu.matmul %78, %76, %cst_75 {dimension_numbers = #tpu.dot_dimension_numbers<[1], [0], [0], [1], [0, 0, 1, 1], [], []>} : vector<8x4xbf16>, vector<4x288xbf16>, vector<8x288xf32> -> vector<8x288xf32>
    %80 = arith.addf %72, %79 : vector<8x288xf32>
    %c0_76 = arith.constant 0 : index
    %c1_77 = arith.constant 1 : index
    %c0_78 = arith.constant 0 : index
    %c0_79 = arith.constant 0 : index
    %81 = vector.load %arg4[%c0_76, %c1_77, %c0_78, %c0_79] : memref<1x4x8x288xf32, #tpu.memory_space<vmem>>, vector<1x1x8x288xf32>
    %82 = vector.shape_cast %81 : vector<1x1x8x288xf32> to vector<8x288xf32>
    %83 = vector.shape_cast %80 : vector<8x288xf32> to vector<1x1x8x288xf32>
    tpu.vector_store %arg4[%c0_76, %c1_77, %c0_78, %c0_79], %83 {strides = array<i32>} : memref<1x4x8x288xf32, #tpu.memory_space<vmem>>, vector<1x1x8x288xf32>,
    %84 = vector.broadcast %0 : vector<1x288xf32> to vector<8x288xf32>
    %85 = arith.mulf %80, %84 : vector<8x288xf32>
    %cst_80 = arith.constant dense<0.000000e+00> : vector<8xf32>
    %86 = vector.multi_reduction <add>, %85, %cst_80 [1] : vector<8x288xf32> to vector<8xf32>
    %87 = vector.shape_cast %86 : vector<8xf32> to vector<8x1xf32>
    %88 = arith.addf %43, %87 : vector<8x1xf32>
    %89 = arith.mulf %85, %80 : vector<8x288xf32>
    %cst_81 = arith.constant dense<0.000000e+00> : vector<8xf32>
    %90 = vector.multi_reduction <add>, %89, %cst_81 [1] : vector<8x288xf32> to vector<8xf32>
    %91 = vector.shape_cast %90 : vector<8xf32> to vector<8x1xf32>
    %92 = arith.addf %47, %91 : vector<8x1xf32>
    %cst_82 = arith.constant 0.000000e+00 : f32
    %93 = vector.broadcast %cst_82 : f32 to vector<8x288xf32>
    %c0_83 = arith.constant 0 : index
    %c0_84 = arith.constant 0 : index
    %c37 = arith.constant 37 : index
    %94 = vector.load %arg1[%c0_83, %c0_84, %c37] : memref<1x4x384xbf16, #tpu.memory_space<vmem>>, vector<1x4x288xbf16>
    %95 = vector.shape_cast %94 : vector<1x4x288xbf16> to vector<4x288xbf16>
    %cst_85 = arith.constant 0.000000e+00 : bf16
    %96 = vector.broadcast %cst_85 : bf16 to vector<4x288xbf16>
    %97 = arith.maximumf %95, %96 : vector<4x288xbf16>
    %c2_86 = arith.constant 2 : index
    %c0_87 = arith.constant 0 : index
    %c0_88 = arith.constant 0 : index
    %c0_89 = arith.constant 0 : index
    %98 = vector.load %arg2[%c2_86, %c0_87, %c0_88, %c0_89] : memref<4x4x8x4xbf16, #tpu.memory_space<vmem>>, vector<1x1x8x4xbf16>
    %99 = vector.shape_cast %98 : vector<1x1x8x4xbf16> to vector<8x4xbf16>
    %cst_90 = arith.constant dense<0.000000e+00> : vector<8x288xf32>
    %100 = tpu.matmul %99, %97, %cst_90 {dimension_numbers = #tpu.dot_dimension_numbers<[1], [0], [0], [1], [0, 0, 1, 1], [], []>} : vector<8x4xbf16>, vector<4x288xbf16>, vector<8x288xf32> -> vector<8x288xf32>
    %101 = arith.addf %93, %100 : vector<8x288xf32>
    %c0_91 = arith.constant 0 : index
    %c0_92 = arith.constant 0 : index
    %c36 = arith.constant 36 : index
    %102 = vector.load %arg1[%c0_91, %c0_92, %c36] : memref<1x4x384xbf16, #tpu.memory_space<vmem>>, vector<1x4x288xbf16>
    %103 = vector.shape_cast %102 : vector<1x4x288xbf16> to vector<4x288xbf16>
    %cst_93 = arith.constant 0.000000e+00 : bf16
    %104 = vector.broadcast %cst_93 : bf16 to vector<4x288xbf16>
    %105 = arith.maximumf %103, %104 : vector<4x288xbf16>
    %c2_94 = arith.constant 2 : index
    %c1_95 = arith.constant 1 : index
    %c0_96 = arith.constant 0 : index
    %c0_97 = arith.constant 0 : index
    %106 = vector.load %arg2[%c2_94, %c1_95, %c0_96, %c0_97] : memref<4x4x8x4xbf16, #tpu.memory_space<vmem>>, vector<1x1x8x4xbf16>
    %107 = vector.shape_cast %106 : vector<1x1x8x4xbf16> to vector<8x4xbf16>
    %cst_98 = arith.constant dense<0.000000e+00> : vector<8x288xf32>
    %108 = tpu.matmul %107, %105, %cst_98 {dimension_numbers = #tpu.dot_dimension_numbers<[1], [0], [0], [1], [0, 0, 1, 1], [], []>} : vector<8x4xbf16>, vector<4x288xbf16>, vector<8x288xf32> -> vector<8x288xf32>
    %109 = arith.addf %101, %108 : vector<8x288xf32>
    %c0_99 = arith.constant 0 : index
    %c0_100 = arith.constant 0 : index
    %c19_101 = arith.constant 19 : index
    %110 = vector.load %arg1[%c0_99, %c0_100, %c19_101] : memref<1x4x384xbf16, #tpu.memory_space<vmem>>, vector<1x4x288xbf16>
    %111 = vector.shape_cast %110 : vector<1x4x288xbf16> to vector<4x288xbf16>
    %cst_102 = arith.constant 0.000000e+00 : bf16
    %112 = vector.broadcast %cst_102 : bf16 to vector<4x288xbf16>
    %113 = arith.maximumf %111, %112 : vector<4x288xbf16>
    %c2_103 = arith.constant 2 : index
    %c2_104 = arith.constant 2 : index
    %c0_105 = arith.constant 0 : index
    %c0_106 = arith.constant 0 : index
    %114 = vector.load %arg2[%c2_103, %c2_104, %c0_105, %c0_106] : memref<4x4x8x4xbf16, #tpu.memory_space<vmem>>, vector<1x1x8x4xbf16>
    %115 = vector.shape_cast %114 : vector<1x1x8x4xbf16> to vector<8x4xbf16>
    %cst_107 = arith.constant dense<0.000000e+00> : vector<8x288xf32>
    %116 = tpu.matmul %115, %113, %cst_107 {dimension_numbers = #tpu.dot_dimension_numbers<[1], [0], [0], [1], [0, 0, 1, 1], [], []>} : vector<8x4xbf16>, vector<4x288xbf16>, vector<8x288xf32> -> vector<8x288xf32>
    %117 = arith.addf %109, %116 : vector<8x288xf32>
    %c0_108 = arith.constant 0 : index
    %c0_109 = arith.constant 0 : index
    %c18_110 = arith.constant 18 : index
    %118 = vector.load %arg1[%c0_108, %c0_109, %c18_110] : memref<1x4x384xbf16, #tpu.memory_space<vmem>>, vector<1x4x288xbf16>
    %119 = vector.shape_cast %118 : vector<1x4x288xbf16> to vector<4x288xbf16>
    %cst_111 = arith.constant 0.000000e+00 : bf16
    %120 = vector.broadcast %cst_111 : bf16 to vector<4x288xbf16>
    %121 = arith.maximumf %119, %120 : vector<4x288xbf16>
    %c2_112 = arith.constant 2 : index
    %c3_113 = arith.constant 3 : index
    %c0_114 = arith.constant 0 : index
    %c0_115 = arith.constant 0 : index
    %122 = vector.load %arg2[%c2_112, %c3_113, %c0_114, %c0_115] : memref<4x4x8x4xbf16, #tpu.memory_space<vmem>>, vector<1x1x8x4xbf16>
    %123 = vector.shape_cast %122 : vector<1x1x8x4xbf16> to vector<8x4xbf16>
    %cst_116 = arith.constant dense<0.000000e+00> : vector<8x288xf32>
    %124 = tpu.matmul %123, %121, %cst_116 {dimension_numbers = #tpu.dot_dimension_numbers<[1], [0], [0], [1], [0, 0, 1, 1], [], []>} : vector<8x4xbf16>, vector<4x288xbf16>, vector<8x288xf32> -> vector<8x288xf32>
    %125 = arith.addf %117, %124 : vector<8x288xf32>
    %c0_117 = arith.constant 0 : index
    %c2_118 = arith.constant 2 : index
    %c0_119 = arith.constant 0 : index
    %c0_120 = arith.constant 0 : index
    %126 = vector.load %arg4[%c0_117, %c2_118, %c0_119, %c0_120] : memref<1x4x8x288xf32, #tpu.memory_space<vmem>>, vector<1x1x8x288xf32>
    %127 = vector.shape_cast %126 : vector<1x1x8x288xf32> to vector<8x288xf32>
    %128 = vector.shape_cast %125 : vector<8x288xf32> to vector<1x1x8x288xf32>
    tpu.vector_store %arg4[%c0_117, %c2_118, %c0_119, %c0_120], %128 {strides = array<i32>} : memref<1x4x8x288xf32, #tpu.memory_space<vmem>>, vector<1x1x8x288xf32>,
    %129 = vector.broadcast %0 : vector<1x288xf32> to vector<8x288xf32>
    %130 = arith.mulf %125, %129 : vector<8x288xf32>
    %cst_121 = arith.constant dense<0.000000e+00> : vector<8xf32>
    %131 = vector.multi_reduction <add>, %130, %cst_121 [1] : vector<8x288xf32> to vector<8xf32>
    %132 = vector.shape_cast %131 : vector<8xf32> to vector<8x1xf32>
    %133 = arith.addf %88, %132 : vector<8x1xf32>
    %134 = arith.mulf %130, %125 : vector<8x288xf32>
    %cst_122 = arith.constant dense<0.000000e+00> : vector<8xf32>
    %135 = vector.multi_reduction <add>, %134, %cst_122 [1] : vector<8x288xf32> to vector<8xf32>
    %136 = vector.shape_cast %135 : vector<8xf32> to vector<8x1xf32>
    %137 = arith.addf %92, %136 : vector<8x1xf32>
    %cst_123 = arith.constant 0.000000e+00 : f32
    %138 = vector.broadcast %cst_123 : f32 to vector<8x288xf32>
    %c0_124 = arith.constant 0 : index
    %c0_125 = arith.constant 0 : index
    %c38 = arith.constant 38 : index
    %139 = vector.load %arg1[%c0_124, %c0_125, %c38] : memref<1x4x384xbf16, #tpu.memory_space<vmem>>, vector<1x4x288xbf16>
    %140 = vector.shape_cast %139 : vector<1x4x288xbf16> to vector<4x288xbf16>
    %cst_126 = arith.constant 0.000000e+00 : bf16
    %141 = vector.broadcast %cst_126 : bf16 to vector<4x288xbf16>
    %142 = arith.maximumf %140, %141 : vector<4x288xbf16>
    %c3_127 = arith.constant 3 : index
    %c0_128 = arith.constant 0 : index
    %c0_129 = arith.constant 0 : index
    %c0_130 = arith.constant 0 : index
    %143 = vector.load %arg2[%c3_127, %c0_128, %c0_129, %c0_130] : memref<4x4x8x4xbf16, #tpu.memory_space<vmem>>, vector<1x1x8x4xbf16>
    %144 = vector.shape_cast %143 : vector<1x1x8x4xbf16> to vector<8x4xbf16>
    %cst_131 = arith.constant dense<0.000000e+00> : vector<8x288xf32>
    %145 = tpu.matmul %144, %142, %cst_131 {dimension_numbers = #tpu.dot_dimension_numbers<[1], [0], [0], [1], [0, 0, 1, 1], [], []>} : vector<8x4xbf16>, vector<4x288xbf16>, vector<8x288xf32> -> vector<8x288xf32>
    %146 = arith.addf %138, %145 : vector<8x288xf32>
    %c0_132 = arith.constant 0 : index
    %c0_133 = arith.constant 0 : index
    %c37_134 = arith.constant 37 : index
    %147 = vector.load %arg1[%c0_132, %c0_133, %c37_134] : memref<1x4x384xbf16, #tpu.memory_space<vmem>>, vector<1x4x288xbf16>
    %148 = vector.shape_cast %147 : vector<1x4x288xbf16> to vector<4x288xbf16>
    %cst_135 = arith.constant 0.000000e+00 : bf16
    %149 = vector.broadcast %cst_135 : bf16 to vector<4x288xbf16>
    %150 = arith.maximumf %148, %149 : vector<4x288xbf16>
    %c3_136 = arith.constant 3 : index
    %c1_137 = arith.constant 1 : index
    %c0_138 = arith.constant 0 : index
    %c0_139 = arith.constant 0 : index
    %151 = vector.load %arg2[%c3_136, %c1_137, %c0_138, %c0_139] : memref<4x4x8x4xbf16, #tpu.memory_space<vmem>>, vector<1x1x8x4xbf16>
    %152 = vector.shape_cast %151 : vector<1x1x8x4xbf16> to vector<8x4xbf16>
    %cst_140 = arith.constant dense<0.000000e+00> : vector<8x288xf32>
    %153 = tpu.matmul %152, %150, %cst_140 {dimension_numbers = #tpu.dot_dimension_numbers<[1], [0], [0], [1], [0, 0, 1, 1], [], []>} : vector<8x4xbf16>, vector<4x288xbf16>, vector<8x288xf32> -> vector<8x288xf32>
    %154 = arith.addf %146, %153 : vector<8x288xf32>
    %c0_141 = arith.constant 0 : index
    %c0_142 = arith.constant 0 : index
    %c20_143 = arith.constant 20 : index
    %155 = vector.load %arg1[%c0_141, %c0_142, %c20_143] : memref<1x4x384xbf16, #tpu.memory_space<vmem>>, vector<1x4x288xbf16>
    %156 = vector.shape_cast %155 : vector<1x4x288xbf16> to vector<4x288xbf16>
    %cst_144 = arith.constant 0.000000e+00 : bf16
    %157 = vector.broadcast %cst_144 : bf16 to vector<4x288xbf16>
    %158 = arith.maximumf %156, %157 : vector<4x288xbf16>
    %c3_145 = arith.constant 3 : index
    %c2_146 = arith.constant 2 : index
    %c0_147 = arith.constant 0 : index
    %c0_148 = arith.constant 0 : index
    %159 = vector.load %arg2[%c3_145, %c2_146, %c0_147, %c0_148] : memref<4x4x8x4xbf16, #tpu.memory_space<vmem>>, vector<1x1x8x4xbf16>
    %160 = vector.shape_cast %159 : vector<1x1x8x4xbf16> to vector<8x4xbf16>
    %cst_149 = arith.constant dense<0.000000e+00> : vector<8x288xf32>
    %161 = tpu.matmul %160, %158, %cst_149 {dimension_numbers = #tpu.dot_dimension_numbers<[1], [0], [0], [1], [0, 0, 1, 1], [], []>} : vector<8x4xbf16>, vector<4x288xbf16>, vector<8x288xf32> -> vector<8x288xf32>
    %162 = arith.addf %154, %161 : vector<8x288xf32>
    %c0_150 = arith.constant 0 : index
    %c0_151 = arith.constant 0 : index
    %c19_152 = arith.constant 19 : index
    %163 = vector.load %arg1[%c0_150, %c0_151, %c19_152] : memref<1x4x384xbf16, #tpu.memory_space<vmem>>, vector<1x4x288xbf16>
    %164 = vector.shape_cast %163 : vector<1x4x288xbf16> to vector<4x288xbf16>
    %cst_153 = arith.constant 0.000000e+00 : bf16
    %165 = vector.broadcast %cst_153 : bf16 to vector<4x288xbf16>
    %166 = arith.maximumf %164, %165 : vector<4x288xbf16>
    %c3_154 = arith.constant 3 : index
    %c3_155 = arith.constant 3 : index
    %c0_156 = arith.constant 0 : index
    %c0_157 = arith.constant 0 : index
    %167 = vector.load %arg2[%c3_154, %c3_155, %c0_156, %c0_157] : memref<4x4x8x4xbf16, #tpu.memory_space<vmem>>, vector<1x1x8x4xbf16>
    %168 = vector.shape_cast %167 : vector<1x1x8x4xbf16> to vector<8x4xbf16>
    %cst_158 = arith.constant dense<0.000000e+00> : vector<8x288xf32>
    %169 = tpu.matmul %168, %166, %cst_158 {dimension_numbers = #tpu.dot_dimension_numbers<[1], [0], [0], [1], [0, 0, 1, 1], [], []>} : vector<8x4xbf16>, vector<4x288xbf16>, vector<8x288xf32> -> vector<8x288xf32>
    %170 = arith.addf %162, %169 : vector<8x288xf32>
    %c0_159 = arith.constant 0 : index
    %c3_160 = arith.constant 3 : index
    %c0_161 = arith.constant 0 : index
    %c0_162 = arith.constant 0 : index
    %171 = vector.load %arg4[%c0_159, %c3_160, %c0_161, %c0_162] : memref<1x4x8x288xf32, #tpu.memory_space<vmem>>, vector<1x1x8x288xf32>
    %172 = vector.shape_cast %171 : vector<1x1x8x288xf32> to vector<8x288xf32>
    %173 = vector.shape_cast %170 : vector<8x288xf32> to vector<1x1x8x288xf32>
    tpu.vector_store %arg4[%c0_159, %c3_160, %c0_161, %c0_162], %173 {strides = array<i32>} : memref<1x4x8x288xf32, #tpu.memory_space<vmem>>, vector<1x1x8x288xf32>,
    %174 = vector.broadcast %0 : vector<1x288xf32> to vector<8x288xf32>
    %175 = arith.mulf %170, %174 : vector<8x288xf32>
    %cst_163 = arith.constant dense<0.000000e+00> : vector<8xf32>
    %176 = vector.multi_reduction <add>, %175, %cst_163 [1] : vector<8x288xf32> to vector<8xf32>
    %177 = vector.shape_cast %176 : vector<8xf32> to vector<8x1xf32>
    %178 = arith.addf %133, %177 : vector<8x1xf32>
    %179 = arith.mulf %175, %170 : vector<8x288xf32>
    %cst_164 = arith.constant dense<0.000000e+00> : vector<8xf32>
    %180 = vector.multi_reduction <add>, %179, %cst_164 [1] : vector<8x288xf32> to vector<8xf32>
    %181 = vector.shape_cast %180 : vector<8xf32> to vector<8x1xf32>
    %182 = arith.addf %137, %181 : vector<8x1xf32>
    %c0_165 = arith.constant 0 : index
    %c0_166 = arith.constant 0 : index
    %c0_167 = arith.constant 0 : index
    %183 = vector.load %arg5[%c0_165, %c0_166, %c0_167] : memref<1x8x1xf32, #tpu.memory_space<vmem>>, vector<1x8x1xf32>
    %184 = vector.shape_cast %183 : vector<1x8x1xf32> to vector<8x1xf32>
    %185 = vector.shape_cast %178 : vector<8x1xf32> to vector<1x8x1xf32>
    tpu.vector_store %arg5[%c0_165, %c0_166, %c0_167], %185 {strides = array<i32>} : memref<1x8x1xf32, #tpu.memory_space<vmem>>, vector<1x8x1xf32>,
    %c0_168 = arith.constant 0 : index
    %c0_169 = arith.constant 0 : index
    %c0_170 = arith.constant 0 : index
    %186 = vector.load %arg6[%c0_168, %c0_169, %c0_170] : memref<1x8x1xf32, #tpu.memory_space<vmem>>, vector<1x8x1xf32>
    %187 = vector.shape_cast %186 : vector<1x8x1xf32> to vector<8x1xf32>
    %188 = vector.shape_cast %182 : vector<8x1xf32> to vector<1x8x1xf32>
    tpu.vector_store %arg6[%c0_168, %c0_169, %c0_170], %188 {strides = array<i32>} : memref<1x8x1xf32, #tpu.memory_space<vmem>>, vector<1x8x1xf32>,
    return
  }
  func.func @transform_0(%arg0: i32) -> (i32, i32, i32) {
    %c0_i32 = arith.constant 0 : i32
    %c0_i32_0 = arith.constant 0 : i32
    %c0_i32_1 = arith.constant 0 : i32
    return %arg0, %c0_i32, %c0_i32_0 : i32, i32, i32
  }
  func.func @transform_1(%arg0: i32) -> (i32, i32, i32, i32) {
    %c0_i32 = arith.constant 0 : i32
    %c0_i32_0 = arith.constant 0 : i32
    %c0_i32_1 = arith.constant 0 : i32
    %c0_i32_2 = arith.constant 0 : i32
    %c0_i32_3 = arith.constant 0 : i32
    return %c0_i32, %c0_i32_0, %c0_i32_1, %c0_i32_2 : i32, i32, i32, i32
  }
  func.func @transform_2(%arg0: i32) -> (i32, i32) {
    %c0_i32 = arith.constant 0 : i32
    %c0_i32_0 = arith.constant 0 : i32
    %c0_i32_1 = arith.constant 0 : i32
    return %c0_i32, %c0_i32_0 : i32, i32
  }
  func.func @transform_3(%arg0: i32) -> (i32, i32, i32, i32) {
    %c0_i32 = arith.constant 0 : i32
    %c0_i32_0 = arith.constant 0 : i32
    %c0_i32_1 = arith.constant 0 : i32
    %c0_i32_2 = arith.constant 0 : i32
    return %arg0, %c0_i32, %c0_i32_0, %c0_i32_1 : i32, i32, i32, i32
  }
  func.func @transform_4(%arg0: i32) -> (i32, i32, i32) {
    %c0_i32 = arith.constant 0 : i32
    %c0_i32_0 = arith.constant 0 : i32
    %c0_i32_1 = arith.constant 0 : i32
    return %arg0, %c0_i32, %c0_i32_0 : i32, i32, i32
  }
  func.func @transform_5(%arg0: i32) -> (i32, i32, i32) {
    %c0_i32 = arith.constant 0 : i32
    %c0_i32_0 = arith.constant 0 : i32
    %c0_i32_1 = arith.constant 0 : i32
    return %arg0, %c0_i32, %c0_i32_0 : i32, i32, i32
  }
}

</mosaic_0001>

<llo_original>
// kernel: tpu_custom_call.1
$region0: #{tpu_custom_call.1}
  #allocation0 [shape = 'u32[]', space=smem, size = 0x4, offset = 0x4, fixed_abs, tag = 'smem constant byte address 0x4 - core index']
  #allocation1 [shape = 'u32[72,128]{1,0:T(1,128)}', space=vmem, size = 0x9000, scoped, tag = 'internal scratch']
  %s0 = inlined_call_operand.vmem [shape: bf16[2,4,384], index: 0, kind: input, shape index: {}]
  %s1 = inlined_call_operand.vmem [shape: bf16[4,4,8,4], index: 1, kind: input, shape index: {}]
  %s2 = inlined_call_operand.vmem [shape: f32[1,288], index: 2, kind: input, shape index: {}]
  %s3 = inlined_call_operand.hbm [shape: f32[2,4,8,288], index: 3, kind: output, shape index: {0}]
  %s4 = inlined_call_operand.vmem [shape: f32[2,8,1], index: 4, kind: output, shape index: {1}]
  %s5 = inlined_call_operand.vmem [shape: f32[2,8,1], index: 5, kind: output, shape index: {2}]
  %6 = xla_tuple %s3, %s4, %s5
  %s7 = sld [smem:[#allocation0]]
  $region61: #{tpu_custom_call.1} parent=0
    _
  %s9 = ssub.s32 1, %s7
  %s10 = scalar_select 0, %s9, %s7
  $region1: #{tpu_custom_call.1} parent=0
    #allocation2 [shape = 'u8[98304]{0}', space=vmem, size = 0x18000, scoped, tag = 'output window, operand 0']
    #allocation3 [shape = 's32[2]{0}', space=sflag, size = 0x8, scoped, tag = 'scoped memory for tpu_custom_call.1']
    %11 = vsyncpa [#allocation3], 0
    %s12 = scalar_lea.sflag [#allocation3], 1
    %13 = vsyncpa %s12, 0
    loop: start=0, step=1, limit=4
    $region2: #{tpu_custom_call.1} parent=1 // loop_pre_header
      _
    $region3: #{tpu_custom_call.1} parent=1 // loop_header
      %s15 = sphi 0, %s19
      %p16 = scmp.ge.s32.totalorder %s15, 4
      %s25 = sphi 0, %s27
      %s28 = sphi 0, %s25
      %s29 = sphi 0, %s28
      %s45 = sphi 0, %s29
      %s49 = sphi 0, %s49
      %s51 = sphi 0, %s49
      %s52 = sphi 0, %s51
      %s66 = sphi 0, %s52
      %s70 = sphi 0, %s70
      %s72 = sphi 0, %s70
      %s73 = sphi 0, %s72
      %s87 = sphi 0, %s73
      %s93 = sphi 0, %s95
      %s96 = sphi 0, %s93
      %s97 = sphi 0, %s96
      %s113 = sphi 0, %s97
      %s119 = sphi 0, %s121
      %s122 = sphi 0, %s119
      %s123 = sphi 0, %s122
      %s139 = sphi 0, %s123
      %s145 = sphi 0, %s147
      %s148 = sphi 0, %s145
      %s149 = sphi 0, %s148
      %s165 = sphi 0, %s149
    $region4: #{tpu_custom_call.1} parent=1 // loop_header_branch
      %18 = sbr.rel (%p16) target = $region8
    $region5: #{tpu_custom_call.1} parent=1 // loop_body
      %s20 = ssub.s32 %s15, 1
      %s21 = ssub.s32 %s15, 2
      %s22 = sadd.s32 %s15, 1
      %s23 = ssub.s32 %s15, %s22
      %p24 = scmp.eq.s32.totalorder %s23, 0
      %s26 = sadd.s32 %s25, 1
      %s27 = scalar_select %p24, %s25, %s26
      %p30 = pneg %p24
      %p31 = scmp.eq.s32.totalorder %s15, 1
      %p32 = por %p30, %p31
      %p33 = scmp.ne.s32.totalorder %s25, %s28
      %p34 = scmp.eq.s32.totalorder %s15, 0
      %p35 = por %p33, %p34
      %p36 = scmp.ne.s32.totalorder %s25, %s28
      %p37 = scmp.eq.s32.totalorder %s20, 1
      %p38 = por %p36, %p37
      %p39 = scmp.ne.s32.totalorder %s28, %s29
      %p40 = scmp.eq.s32.totalorder %s20, 0
      %p41 = por %p39, %p40
      %p42 = scmp.ne.s32.totalorder %s28, %s29
      %p43 = scmp.eq.s32.totalorder %s21, 1
      %p44 = por %p42, %p43
      %p46 = scmp.ne.s32.totalorder %s29, %s45
      %p47 = scmp.eq.s32.totalorder %s21, 0
      %p48 = por %p46, %p47
      %s50 = sadd.s32 %s49, 1
      %p53 = scmp.eq.s32.totalorder %s15, 1
      %p54 = scmp.ne.s32.totalorder %s49, %s51
      %p55 = scmp.eq.s32.totalorder %s15, 0
      %p56 = por %p54, %p55
      %p57 = scmp.ne.s32.totalorder %s49, %s51
      %p58 = scmp.eq.s32.totalorder %s20, 1
      %p59 = por %p57, %p58
      %p60 = scmp.ne.s32.totalorder %s51, %s52
      %p61 = scmp.eq.s32.totalorder %s20, 0
      %p62 = por %p60, %p61
      %p63 = scmp.ne.s32.totalorder %s51, %s52
      %p64 = scmp.eq.s32.totalorder %s21, 1
      %p65 = por %p63, %p64
      %p67 = scmp.ne.s32.totalorder %s52, %s66
      %p68 = scmp.eq.s32.totalorder %s21, 0
      %p69 = por %p67, %p68
      %s71 = sadd.s32 %s70, 1
      %p74 = scmp.eq.s32.totalorder %s15, 1
      %p75 = scmp.ne.s32.totalorder %s70, %s72
      %p76 = scmp.eq.s32.totalorder %s15, 0
      %p77 = por %p75, %p76
      %p78 = scmp.ne.s32.totalorder %s70, %s72
      %p79 = scmp.eq.s32.totalorder %s20, 1
      %p80 = por %p78, %p79
      %p81 = scmp.ne.s32.totalorder %s72, %s73
      %p82 = scmp.eq.s32.totalorder %s20, 0
      %p83 = por %p81, %p82
      %p84 = scmp.ne.s32.totalorder %s72, %s73
      %p85 = scmp.eq.s32.totalorder %s21, 1
      %p86 = por %p84, %p85
      %p88 = scmp.ne.s32.totalorder %s73, %s87
      %p89 = scmp.eq.s32.totalorder %s21, 0
      %p90 = por %p88, %p89
      %s91 = ssub.s32 %s15, %s22
      %p92 = scmp.eq.s32.totalorder %s91, 0
      %s94 = sadd.s32 %s93, 1
      %s95 = scalar_select %p92, %s93, %s94
      %p98 = pneg %p92
      %p99 = scmp.eq.s32.totalorder %s15, 1
      %p100 = por %p98, %p99
      %p101 = scmp.ne.s32.totalorder %s93, %s96
      %p102 = scmp.eq.s32.totalorder %s15, 0
      %p103 = por %p101, %p102
      %p104 = scmp.ne.s32.totalorder %s93, %s96
      %p105 = scmp.eq.s32.totalorder %s20, 1
      %p106 = por %p104, %p105
      %p107 = scmp.ne.s32.totalorder %s96, %s97
      %p108 = scmp.eq.s32.totalorder %s20, 0
      %p109 = por %p107, %p108
      %p110 = scmp.ne.s32.totalorder %s96, %s97
      %p111 = scmp.eq.s32.totalorder %s21, 1
      %p112 = por %p110, %p111
      %p114 = scmp.ne.s32.totalorder %s97, %s113
      %p115 = scmp.eq.s32.totalorder %s21, 0
      %p116 = por %p114, %p115
      %s117 = ssub.s32 %s15, %s22
      %p118 = scmp.eq.s32.totalorder %s117, 0
      %s120 = sadd.s32 %s119, 1
      %s121 = scalar_select %p118, %s119, %s120
      %p124 = pneg %p118
      %p125 = scmp.eq.s32.totalorder %s15, 1
      %p126 = por %p124, %p125
      %p127 = scmp.ne.s32.totalorder %s119, %s122
      %p128 = scmp.eq.s32.totalorder %s15, 0
      %p129 = por %p127, %p128
      %p130 = scmp.ne.s32.totalorder %s119, %s122
      %p131 = scmp.eq.s32.totalorder %s20, 1
      %p132 = por %p130, %p131
      %p133 = scmp.ne.s32.totalorder %s122, %s123
      %p134 = scmp.eq.s32.totalorder %s20, 0
      %p135 = por %p133, %p134
      %p136 = scmp.ne.s32.totalorder %s122, %s123
      %p137 = scmp.eq.s32.totalorder %s21, 1
      %p138 = por %p136, %p137
      %p140 = scmp.ne.s32.totalorder %s123, %s139
      %p141 = scmp.eq.s32.totalorder %s21, 0
      %p142 = por %p140, %p141
      %s143 = ssub.s32 %s15, %s22
      %p144 = scmp.eq.s32.totalorder %s143, 0
      %s146 = sadd.s32 %s145, 1
      %s147 = scalar_select %p144, %s145, %s146
      %p150 = pneg %p144
      %p151 = scmp.eq.s32.totalorder %s15, 1
      %p152 = por %p150, %p151
      %p153 = scmp.ne.s32.totalorder %s145, %s148
      %p154 = scmp.eq.s32.totalorder %s15, 0
      %p155 = por %p153, %p154
      %p156 = scmp.ne.s32.totalorder %s145, %s148
      %p157 = scmp.eq.s32.totalorder %s20, 1
      %p158 = por %p156, %p157
      %p159 = scmp.ne.s32.totalorder %s148, %s149
      %p160 = scmp.eq.s32.totalorder %s20, 0
      %p161 = por %p159, %p160
      %p162 = scmp.ne.s32.totalorder %s148, %s149
      %p163 = scmp.eq.s32.totalorder %s21, 1
      %p164 = por %p162, %p163
      %p166 = scmp.ne.s32.totalorder %s149, %s165
      %p167 = scmp.eq.s32.totalorder %s21, 0
      %p168 = por %p166, %p167
      %p169 = scmp.le.s32.totalorder 1, %s15
      %p170 = scmp.lt.s32.totalorder %s15, 3
      %p171 = pnand %p169, %p170
      %p172 = pneg %p171
      // Predicated region
      $region9: #{tpu_custom_call.1} parent=5 // pred_check
        _
      $region10: #{tpu_custom_call.1} parent=5 // pred_check_branch
        %174 = sbr.rel (%p171) target = $region12
      $region11: #{tpu_custom_call.1} parent=5 // pred_region
        %s175 = ssub.s32 %s15, 1
        // Predicated region
        $region13: #{tpu_custom_call.1} parent=11 // pred_check
          %p176 = pneg %p62
        $region14: #{tpu_custom_call.1} parent=11 // pred_check_branch
          %178 = sbr.rel (%p176) target = $region16
        $region15: #{tpu_custom_call.1} parent=11 // pred_region
          _
        $region16: #{tpu_custom_call.1} parent=11 // pred_fallthru
          _
        // Predicated region
        $region17: #{tpu_custom_call.1} parent=11 // pred_check
          %p179 = pneg %p83
        $region18: #{tpu_custom_call.1} parent=11 // pred_check_branch
          %181 = sbr.rel (%p179) target = $region20
        $region19: #{tpu_custom_call.1} parent=11 // pred_region
          _
        $region20: #{tpu_custom_call.1} parent=11 // pred_fallthru
          _
      $region12: #{tpu_custom_call.1} parent=5 // pred_fallthru
        _
      %p182 = scmp.lt.s32.totalorder %s15, 2
      // Predicated region
      $region21: #{tpu_custom_call.1} parent=5 // pred_check
        %p183 = pneg %p182
      $region22: #{tpu_custom_call.1} parent=5 // pred_check_branch
        %185 = sbr.rel (%p183) target = $region24
      $region23: #{tpu_custom_call.1} parent=5 // pred_region
        // Predicated region
        $region25: #{tpu_custom_call.1} parent=23 // pred_check
          %p186 = pneg %p35
        $region26: #{tpu_custom_call.1} parent=23 // pred_check_branch
          %188 = sbr.rel (%p186) target = $region28
        $region27: #{tpu_custom_call.1} parent=23 // pred_region
          %p189 = scmp.lt.s32.totalorder %s15, 1
          %s190 = scalar_select %p189, %s15, 1
          %s191 = smul.addr %s190, 3
          %s192 = smul.addr %s191, 2
          %s193 = scalar_lea.vmem %s0, %s192
        $region28: #{tpu_custom_call.1} parent=23 // pred_fallthru
          _
      $region24: #{tpu_custom_call.1} parent=5 // pred_fallthru
        _
      %p194 = scmp.le.s32.totalorder 1, %s15
      %p195 = scmp.lt.s32.totalorder %s15, 3
      %p196 = pnand %p194, %p195
      %p197 = pneg %p196
      // Predicated region
      $region29: #{tpu_custom_call.1} parent=5 // pred_check
        _
      $region30: #{tpu_custom_call.1} parent=5 // pred_check_branch
        %199 = sbr.rel (%p196) target = $region32
      $region31: #{tpu_custom_call.1} parent=5 // pred_region
        %s200 = ssub.s32 %s15, 1
        %p201 = scmp.lt.s32.totalorder %s20, 1
        %s202 = scalar_select %p201, %s20, 1
        %s203 = smul.addr %s202, 3
        %s204 = smul.addr %s203, 2
        %s205 = scalar_lea.vmem %s0, %s204
        %p206 = pneg %p41
        %p207 = pneg %p38
        %p208 = pneg %p62
        %p209 = pneg %p59
        %p210 = pneg %p83
        %p211 = pneg %p80
        %p212 = pneg %p109
        %p213 = pneg %p106
        %s214 = sand.u32 %s96, 1
        %s215 = scalar_lea.sflag [#allocation3], %s214
        %s216 = sand.u32 %s96, 1
        %s217 = smul.addr %s216, 96
        %s218 = scalar_lea.vmem [#allocation2], %s217
        %p219 = pneg %p135
        %p220 = pneg %p132
        %p221 = scmp.lt.s32.totalorder %s20, 1
        %s222 = scalar_select %p221, %s20, 1
        %s223 = smul.addr %s222, 8
        %s224 = scalar_lea.vmem %s4, %s223
        %p225 = pneg %p161
        %p226 = pneg %p158
        %p227 = scmp.lt.s32.totalorder %s20, 1
        %s228 = scalar_select %p227, %s20, 1
        %s229 = smul.addr %s228, 8
        %s230 = scalar_lea.vmem %s5, %s229
        %p231 = scmp.lt.s32.totalorder %s20, 1
        %s232 = scalar_select %p231, %s20, 1
        %s233 = smul.addr %s232, 3
        %s234 = smul.addr %s233, 2
        %s235 = scalar_lea.vmem %s0, %s234
        %p236 = scmp.lt.s32.totalorder %s20, 1
        %s237 = scalar_select %p236, %s20, 1
        %s238 = smul.addr %s237, 8
        %s239 = scalar_lea.vmem %s4, %s238
        %p240 = scmp.lt.s32.totalorder %s20, 1
        %s241 = scalar_select %p240, %s20, 1
        %s242 = smul.addr %s241, 8
        %s243 = scalar_lea.vmem %s5, %s242
        %v245 = vld [vmem:[%s2] sm:$0x7]
        %v246 = vld [vmem:[%s235] sm:$0x3f]
        %v247 = vunpack.c.l.bf16 %v246
        %v248 = vunpack.c.h.bf16 %v246
        %v249 = vmax.f32 %v247, 0.0
        %v250 = vmax.f32 %v248, 0.0
        %253 = vst [vmem:[#allocation1] ss:$2 sm:$0xff] %v249
        %s254 = scalar_lea.vmem [#allocation1], 16
        %255 = vst [vmem:[%s254] ss:$2 sm:$0xff] %v250
        %v256 = vld.sshfl [vmem:[#allocation1] sm:$0xff pattern:$0x75316420]
        %v257 = vld.sshfl [vmem:[#allocation1 + $0x8] sm:$0xff pattern:$0x75316420]
        %v258 = vld.sshfl [vmem:[#allocation1 + $0x10] sm:$0xff pattern:$0x75316420]
        %v262 = vpack.c.bf16 %v256, %v256
        %v263 = vpack.c.bf16 %v257, %v257
        %v264 = vpack.c.bf16 %v258, %v258
        %v265 = vld [vmem:[%s1] sm:$0xf]
        %v266 = vld [vmem:[%s235] sm:$0x3f]
        %v267 = vunpack.c.l.bf16 %v266
        %v268 = vunpack.c.h.bf16 %v266
        %v269 = vmax.f32 %v267, 0.0
        %v270 = vmax.f32 %v268, 0.0
        %273 = vst [vmem:[#allocation1] ss:$2 sm:$0xff] %v269
        %s274 = scalar_lea.vmem [#allocation1], 16
        %275 = vst [vmem:[%s274] ss:$2 sm:$0xff] %v270
        %v276 = vld.sshfl [vmem:[#allocation1] sm:$0xff pattern:$0x75316420]
        %v277 = vld.sshfl [vmem:[#allocation1 + $0x8] sm:$0xff pattern:$0x75316420]
        %v278 = vld.sshfl [vmem:[#allocation1 + $0x10] sm:$0xff pattern:$0x75316420]
        %v282 = vpack.c.bf16 %v276, %v276
        %v283 = vpack.c.bf16 %v277, %v277
        %v284 = vpack.c.bf16 %v278, %v278
        %s285 = scalar_lea.vmem %s1, 4
        %v286 = vld [vmem:[%s285] sm:$0xf]
        %290 = vrot.lane.b32.xlu0 %v282, 110
        %v291 = vpop.permute.xlu0 %290
        %292 = vrot.lane.b32.xlu0 %v283, 110
        %v293 = vpop.permute.xlu0 %292
        %294 = vrot.lane.b32.xlu0 %v284, 110
        %v295 = vpop.permute.xlu0 %294
        %vm296 = vcmask 900096
        %v297 = vsel %vm296, %v291, %v293
        %v298 = vsel %vm296, %v293, %v295
        %vm299 = vcmask 31744
        %v301 = vsel %vm299, %v286, 0
        %vm303 = vcmask 1041408
        %v305 = vsel %vm303, %v297, 0
        %v308 = vsel %vm303, %v298, 0
        %v311 = vsel %vm303, %v295, 0
        %313 = vmatpush.bf16.msra.mxu0 0
        %314 = vmatpush.bf16.msra.mxu0 0
        %315 = vmatpush.bf16.msra.mxu0 0
        %316 = vmatpush.bf16.msra.mxu0 0
        %317 = vmatpush.bf16.msra.mxu0 0
        %318 = vmatpush.bf16.msra.mxu0 0
        %319 = vmatpush.bf16.msra.mxu0 0
        %320 = vmatpush.bf16.msra.mxu0 %v305
        %321 = vmatmul.bf16.gmra.mxu0 %v301
        %v322 = vpop.f32.mrf.mxu0
        %v323 = vadd.f32 0.0, %v322
        %v324 = vpop.f32.mrf.mxu0
        %325 = vdwg.mxu0
        %326 = vmatpush.bf16.msra.mxu0 0
        %327 = vmatpush.bf16.msra.mxu0 0
        %328 = vmatpush.bf16.msra.mxu0 0
        %329 = vmatpush.bf16.msra.mxu0 0
        %330 = vmatpush.bf16.msra.mxu0 0
        %331 = vmatpush.bf16.msra.mxu0 0
        %332 = vmatpush.bf16.msra.mxu0 0
        %333 = vmatpush.bf16.msra.mxu0 %v308
        %334 = vmatmul.bf16.gmra.mxu0 %v301
        %v335 = vpop.f32.mrf.mxu0
        %v336 = vadd.f32 0.0, %v335
        %v337 = vpop.f32.mrf.mxu0
        %338 = vdwg.mxu0
        %339 = vmatpush.bf16.msra.mxu0 0
        %340 = vmatpush.bf16.msra.mxu0 0
        %341 = vmatpush.bf16.msra.mxu0 0
        %342 = vmatpush.bf16.msra.mxu0 0
        %343 = vmatpush.bf16.msra.mxu0 0
        %344 = vmatpush.bf16.msra.mxu0 0
        %345 = vmatpush.bf16.msra.mxu0 0
        %346 = vmatpush.bf16.msra.mxu0 %v311
        %347 = vmatmul.bf16.gmra.mxu0 %v301
        %v348 = vpop.f32.mrf.mxu0
        %v349 = vadd.f32 0.0, %v348
        %v350 = vpop.f32.mrf.mxu0
        %351 = vdwg.mxu0
        %355 = vrot.lane.b32.xlu0 %v262, 109
        %v356 = vpop.permute.xlu0 %355
        %357 = vrot.lane.b32.xlu0 %v263, 109
        %v358 = vpop.permute.xlu0 %357
        %359 = vrot.lane.b32.xlu0 %v264, 109
        %v360 = vpop.permute.xlu0 %359
        %vm361 = vcmask 891904
        %v362 = vsel %vm361, %v356, %v358
        %v363 = vsel %vm361, %v358, %v360
        %v365 = vsel %vm299, %v265, 0
        %v368 = vsel %vm303, %v362, 0
        %v371 = vsel %vm303, %v363, 0
        %v374 = vsel %vm303, %v360, 0
        %376 = vmatpush.bf16.msra.mxu0 0
        %377 = vmatpush.bf16.msra.mxu0 0
        %378 = vmatpush.bf16.msra.mxu0 0
        %379 = vmatpush.bf16.msra.mxu0 0
        %380 = vmatpush.bf16.msra.mxu0 0
        %381 = vmatpush.bf16.msra.mxu0 0
        %382 = vmatpush.bf16.msra.mxu0 0
        %383 = vmatpush.bf16.msra.mxu0 %v368
        %384 = vmatmul.bf16.gmra.mxu0 %v365
        %v385 = vpop.f32.mrf.mxu0
        %v386 = vadd.f32 %v323, %v385
        %v387 = vpop.f32.mrf.mxu0
        %388 = vdwg.mxu0
        %389 = vmatpush.bf16.msra.mxu0 0
        %390 = vmatpush.bf16.msra.mxu0 0
        %391 = vmatpush.bf16.msra.mxu0 0
        %392 = vmatpush.bf16.msra.mxu0 0
        %393 = vmatpush.bf16.msra.mxu0 0
        %394 = vmatpush.bf16.msra.mxu0 0
        %395 = vmatpush.bf16.msra.mxu0 0
        %396 = vmatpush.bf16.msra.mxu0 %v371
        %397 = vmatmul.bf16.gmra.mxu0 %v365
        %v398 = vpop.f32.mrf.mxu0
        %v399 = vadd.f32 %v336, %v398
        %v400 = vpop.f32.mrf.mxu0
        %401 = vdwg.mxu0
        %402 = vmatpush.bf16.msra.mxu0 0
        %403 = vmatpush.bf16.msra.mxu0 0
        %404 = vmatpush.bf16.msra.mxu0 0
        %405 = vmatpush.bf16.msra.mxu0 0
        %406 = vmatpush.bf16.msra.mxu0 0
        %407 = vmatpush.bf16.msra.mxu0 0
        %408 = vmatpush.bf16.msra.mxu0 0
        %409 = vmatpush.bf16.msra.mxu0 %v374
        %410 = vmatmul.bf16.gmra.mxu0 %v365
        %v411 = vpop.f32.mrf.mxu0
        %v412 = vadd.f32 %v349, %v411
        %v413 = vpop.f32.mrf.mxu0
        %414 = vdwg.mxu0
        %v415 = vld [vmem:[%s235] sm:$0x3f]
        %v416 = vunpack.c.l.bf16 %v415
        %v417 = vunpack.c.h.bf16 %v415
        %v418 = vmax.f32 %v416, 0.0
        %v419 = vmax.f32 %v417, 0.0
        %422 = vst [vmem:[#allocation1] ss:$2 sm:$0xff] %v418
        %s423 = scalar_lea.vmem [#allocation1], 16
        %424 = vst [vmem:[%s423] ss:$2 sm:$0xff] %v419
        %v425 = vld.sshfl [vmem:[#allocation1] sm:$0xff pattern:$0x75316420]
        %v426 = vld.sshfl [vmem:[#allocation1 + $0x8] sm:$0xff pattern:$0x75316420]
        %v427 = vld.sshfl [vmem:[#allocation1 + $0x10] sm:$0xff pattern:$0x75316420]
        %v431 = vpack.c.bf16 %v425, %v425
        %v432 = vpack.c.bf16 %v426, %v426
        %v433 = vpack.c.bf16 %v427, %v427
        %s434 = scalar_lea.vmem %s1, 8
        %v435 = vld [vmem:[%s434] sm:$0xf]
        %439 = vrot.lane.b32.xlu0 %v431, 127
        %v440 = vpop.permute.xlu0 %439
        %441 = vrot.lane.b32.xlu0 %v432, 127
        %v442 = vpop.permute.xlu0 %441
        %443 = vrot.lane.b32.xlu0 %v433, 127
        %v444 = vpop.permute.xlu0 %443
        %vm445 = vcmask 1039360
        %v446 = vsel %vm445, %v440, %v442
        %v447 = vsel %vm445, %v442, %v444
        %v449 = vsel %vm299, %v435, 0
        %v452 = vsel %vm303, %v446, 0
        %v455 = vsel %vm303, %v447, 0
        %v458 = vsel %vm303, %v444, 0
        %460 = vmatpush.bf16.msra.mxu0 0
        %461 = vmatpush.bf16.msra.mxu0 0
        %462 = vmatpush.bf16.msra.mxu0 0
        %463 = vmatpush.bf16.msra.mxu0 0
        %464 = vmatpush.bf16.msra.mxu0 0
        %465 = vmatpush.bf16.msra.mxu0 0
        %466 = vmatpush.bf16.msra.mxu0 0
        %467 = vmatpush.bf16.msra.mxu0 %v452
        %468 = vmatmul.bf16.gmra.mxu0 %v449
        %v469 = vpop.f32.mrf.mxu0
        %v470 = vadd.f32 0.0, %v469
        %v471 = vpop.f32.mrf.mxu0
        %472 = vdwg.mxu0
        %473 = vmatpush.bf16.msra.mxu0 0
        %474 = vmatpush.bf16.msra.mxu0 0
        %475 = vmatpush.bf16.msra.mxu0 0
        %476 = vmatpush.bf16.msra.mxu0 0
        %477 = vmatpush.bf16.msra.mxu0 0
        %478 = vmatpush.bf16.msra.mxu0 0
        %479 = vmatpush.bf16.msra.mxu0 0
        %480 = vmatpush.bf16.msra.mxu0 %v455
        %481 = vmatmul.bf16.gmra.mxu0 %v449
        %v482 = vpop.f32.mrf.mxu0
        %v483 = vadd.f32 0.0, %v482
        %v484 = vpop.f32.mrf.mxu0
        %485 = vdwg.mxu0
        %486 = vmatpush.bf16.msra.mxu0 0
        %487 = vmatpush.bf16.msra.mxu0 0
        %488 = vmatpush.bf16.msra.mxu0 0
        %489 = vmatpush.bf16.msra.mxu0 0
        %490 = vmatpush.bf16.msra.mxu0 0
        %491 = vmatpush.bf16.msra.mxu0 0
        %492 = vmatpush.bf16.msra.mxu0 0
        %493 = vmatpush.bf16.msra.mxu0 %v458
        %494 = vmatmul.bf16.gmra.mxu0 %v449
        %v495 = vpop.f32.mrf.mxu0
        %v496 = vadd.f32 0.0, %v495
        %v497 = vpop.f32.mrf.mxu0
        %498 = vdwg.mxu0
        %v499 = vadd.f32 %v386, %v470
        %v500 = vadd.f32 %v399, %v483
        %v501 = vadd.f32 %v412, %v496
        %v502 = vld [vmem:[%s235] sm:$0x3f]
        %v503 = vunpack.c.l.bf16 %v502
        %v504 = vunpack.c.h.bf16 %v502
        %v505 = vmax.f32 %v503, 0.0
        %v506 = vmax.f32 %v504, 0.0
        %509 = vst [vmem:[#allocation1] ss:$2 sm:$0xff] %v505
        %s510 = scalar_lea.vmem [#allocation1], 16
        %511 = vst [vmem:[%s510] ss:$2 sm:$0xff] %v506
        %v512 = vld.sshfl [vmem:[#allocation1] sm:$0xff pattern:$0x75316420]
        %v513 = vld.sshfl [vmem:[#allocation1 + $0x8] sm:$0xff pattern:$0x75316420]
        %v514 = vld.sshfl [vmem:[#allocation1 + $0x10] sm:$0xff pattern:$0x75316420]
        %v518 = vpack.c.bf16 %v512, %v512
        %v519 = vpack.c.bf16 %v513, %v513
        %v520 = vpack.c.bf16 %v514, %v514
        %s521 = scalar_lea.vmem %s1, 12
        %v522 = vld [vmem:[%s521] sm:$0xf]
        %v524 = vsel %vm299, %v522, 0
        %v527 = vsel %vm303, %v518, 0
        %v530 = vsel %vm303, %v519, 0
        %v533 = vsel %vm303, %v520, 0
        %535 = vmatpush.bf16.msra.mxu0 0
        %536 = vmatpush.bf16.msra.mxu0 0
        %537 = vmatpush.bf16.msra.mxu0 0
        %538 = vmatpush.bf16.msra.mxu0 0
        %539 = vmatpush.bf16.msra.mxu0 0
        %540 = vmatpush.bf16.msra.mxu0 0
        %541 = vmatpush.bf16.msra.mxu0 0
        %542 = vmatpush.bf16.msra.mxu0 %v527
        %543 = vmatmul.bf16.gmra.mxu0 %v524
        %v544 = vpop.f32.mrf.mxu0
        %v545 = vadd.f32 0.0, %v544
        %v546 = vpop.f32.mrf.mxu0
        %547 = vdwg.mxu0
        %548 = vmatpush.bf16.msra.mxu0 0
        %549 = vmatpush.bf16.msra.mxu0 0
        %550 = vmatpush.bf16.msra.mxu0 0
        %551 = vmatpush.bf16.msra.mxu0 0
        %552 = vmatpush.bf16.msra.mxu0 0
        %553 = vmatpush.bf16.msra.mxu0 0
        %554 = vmatpush.bf16.msra.mxu0 0
        %555 = vmatpush.bf16.msra.mxu0 %v530
        %556 = vmatmul.bf16.gmra.mxu0 %v524
        %v557 = vpop.f32.mrf.mxu0
        %v558 = vadd.f32 0.0, %v557
        %v559 = vpop.f32.mrf.mxu0
        %560 = vdwg.mxu0
        %561 = vmatpush.bf16.msra.mxu0 0
        %562 = vmatpush.bf16.msra.mxu0 0
        %563 = vmatpush.bf16.msra.mxu0 0
        %564 = vmatpush.bf16.msra.mxu0 0
        %565 = vmatpush.bf16.msra.mxu0 0
        %566 = vmatpush.bf16.msra.mxu0 0
        %567 = vmatpush.bf16.msra.mxu0 0
        %568 = vmatpush.bf16.msra.mxu0 %v533
        %569 = vmatmul.bf16.gmra.mxu0 %v524
        %v570 = vpop.f32.mrf.mxu0
        %v571 = vadd.f32 0.0, %v570
        %v572 = vpop.f32.mrf.mxu0
        %573 = vdwg.mxu0
        %v574 = vadd.f32 %v499, %v545
        %v575 = vadd.f32 %v500, %v558
        %v576 = vadd.f32 %v501, %v571
        %577 = vst [vmem:[%s218] sm:$0xff] %v574
        %578 = vst [vmem:[%s218 + $0x8] sm:$0xff] %v575
        %vm579 = vcmask 261120
        %580 = vst.msk [vmem:[%s218 + $0x10] sm:$0xff] %vm579, %v576
        %v582 = vperm.slane %v245, 0
        %v583 = vperm.slane %v245, 1
        %v584 = vperm.slane %v245, 2
        %v588 = vmul.f32 %v574, %v582
        %v589 = vmul.f32 %v575, %v583
        %v590 = vmul.f32 %v576, %v584
        %v591 = vadd.f32 %v588, %v589
        %v592 = vsel %vm579, %v590, 0.0
        %v593 = vadd.f32 %v591, %v592
        %594 = vadd.xlane.f32.xlu0 %v593
        %v595 = vpop.xlane.xlu0 %594
        %v596 = vadd.f32 %v595, 0.0
        %v597 = vmul.f32 %v588, %v574
        %v598 = vmul.f32 %v589, %v575
        %v599 = vmul.f32 %v590, %v576
        %v600 = vadd.f32 %v597, %v598
        %v601 = vsel %vm579, %v599, 0.0
        %v602 = vadd.f32 %v600, %v601
        %603 = vadd.xlane.f32.xlu0 %v602
        %v604 = vpop.xlane.xlu0 %603
        %v605 = vadd.f32 %v604, 0.0
        %v606 = vld [vmem:[%s235] sm:$0x3f]
        %v607 = vunpack.c.l.bf16 %v606
        %v608 = vunpack.c.h.bf16 %v606
        %v609 = vmax.f32 %v607, 0.0
        %v610 = vmax.f32 %v608, 0.0
        %613 = vst [vmem:[#allocation1] ss:$2 sm:$0xff] %v609
        %s614 = scalar_lea.vmem [#allocation1], 16
        %615 = vst [vmem:[%s614] ss:$2 sm:$0xff] %v610
        %v616 = vld.sshfl [vmem:[#allocation1] sm:$0xff pattern:$0x75316420]
        %v617 = vld.sshfl [vmem:[#allocation1 + $0x8] sm:$0xff pattern:$0x75316420]
        %v618 = vld.sshfl [vmem:[#allocation1 + $0x10] sm:$0xff pattern:$0x75316420]
        %v622 = vpack.c.bf16 %v616, %v616
        %v623 = vpack.c.bf16 %v617, %v617
        %v624 = vpack.c.bf16 %v618, %v618
        %s625 = scalar_lea.vmem %s1, 16
        %v626 = vld [vmem:[%s625] sm:$0xf]
        %v627 = vld [vmem:[%s235] sm:$0x3f]
        %v628 = vunpack.c.l.bf16 %v627
        %v629 = vunpack.c.h.bf16 %v627
        %v630 = vmax.f32 %v628, 0.0
        %v631 = vmax.f32 %v629, 0.0
        %634 = vst [vmem:[#allocation1] ss:$2 sm:$0xff] %v630
        %s635 = scalar_lea.vmem [#allocation1], 16
        %636 = vst [vmem:[%s635] ss:$2 sm:$0xff] %v631
        %v637 = vld.sshfl [vmem:[#allocation1] sm:$0xff pattern:$0x75316420]
        %v638 = vld.sshfl [vmem:[#allocation1 + $0x8] sm:$0xff pattern:$0x75316420]
        %v639 = vld.sshfl [vmem:[#allocation1 + $0x10] sm:$0xff pattern:$0x75316420]
        %v643 = vpack.c.bf16 %v637, %v637
        %v644 = vpack.c.bf16 %v638, %v638
        %v645 = vpack.c.bf16 %v639, %v639
        %s646 = scalar_lea.vmem %s1, 20
        %v647 = vld [vmem:[%s646] sm:$0xf]
        %651 = vrot.lane.b32.xlu0 %v643, 109
        %v652 = vpop.permute.xlu0 %651
        %653 = vrot.lane.b32.xlu0 %v644, 109
        %v654 = vpop.permute.xlu0 %653
        %655 = vrot.lane.b32.xlu0 %v645, 109
        %v656 = vpop.permute.xlu0 %655
        %v657 = vsel %vm361, %v652, %v654
        %v658 = vsel %vm361, %v654, %v656
        %v660 = vsel %vm299, %v647, 0
        %v663 = vsel %vm303, %v657, 0
        %v666 = vsel %vm303, %v658, 0
        %v669 = vsel %vm303, %v656, 0
        %671 = vmatpush.bf16.msra.mxu0 0
        %672 = vmatpush.bf16.msra.mxu0 0
        %673 = vmatpush.bf16.msra.mxu0 0
        %674 = vmatpush.bf16.msra.mxu0 0
        %675 = vmatpush.bf16.msra.mxu0 0
        %676 = vmatpush.bf16.msra.mxu0 0
        %677 = vmatpush.bf16.msra.mxu0 0
        %678 = vmatpush.bf16.msra.mxu0 %v663
        %679 = vmatmul.bf16.gmra.mxu0 %v660
        %v680 = vpop.f32.mrf.mxu0
        %v681 = vadd.f32 0.0, %v680
        %v682 = vpop.f32.mrf.mxu0
        %683 = vdwg.mxu0
        %684 = vmatpush.bf16.msra.mxu0 0
        %685 = vmatpush.bf16.msra.mxu0 0
        %686 = vmatpush.bf16.msra.mxu0 0
        %687 = vmatpush.bf16.msra.mxu0 0
        %688 = vmatpush.bf16.msra.mxu0 0
        %689 = vmatpush.bf16.msra.mxu0 0
        %690 = vmatpush.bf16.msra.mxu0 0
        %691 = vmatpush.bf16.msra.mxu0 %v666
        %692 = vmatmul.bf16.gmra.mxu0 %v660
        %v693 = vpop.f32.mrf.mxu0
        %v694 = vadd.f32 0.0, %v693
        %v695 = vpop.f32.mrf.mxu0
        %696 = vdwg.mxu0
        %697 = vmatpush.bf16.msra.mxu0 0
        %698 = vmatpush.bf16.msra.mxu0 0
        %699 = vmatpush.bf16.msra.mxu0 0
        %700 = vmatpush.bf16.msra.mxu0 0
        %701 = vmatpush.bf16.msra.mxu0 0
        %702 = vmatpush.bf16.msra.mxu0 0
        %703 = vmatpush.bf16.msra.mxu0 0
        %704 = vmatpush.bf16.msra.mxu0 %v669
        %705 = vmatmul.bf16.gmra.mxu0 %v660
        %v706 = vpop.f32.mrf.mxu0
        %v707 = vadd.f32 0.0, %v706
        %v708 = vpop.f32.mrf.mxu0
        %709 = vdwg.mxu0
        %713 = vrot.lane.b32.xlu0 %v622, 108
        %v714 = vpop.permute.xlu0 %713
        %715 = vrot.lane.b32.xlu0 %v623, 108
        %v716 = vpop.permute.xlu0 %715
        %717 = vrot.lane.b32.xlu0 %v624, 108
        %v718 = vpop.permute.xlu0 %717
        %vm719 = vcmask 883712
        %v720 = vsel %vm719, %v714, %v716
        %v721 = vsel %vm719, %v716, %v718
        %v723 = vsel %vm299, %v626, 0
        %v726 = vsel %vm303, %v720, 0
        %v729 = vsel %vm303, %v721, 0
        %v732 = vsel %vm303, %v718, 0
        %734 = vmatpush.bf16.msra.mxu0 0
        %735 = vmatpush.bf16.msra.mxu0 0
        %736 = vmatpush.bf16.msra.mxu0 0
        %737 = vmatpush.bf16.msra.mxu0 0
        %738 = vmatpush.bf16.msra.mxu0 0
        %739 = vmatpush.bf16.msra.mxu0 0
        %740 = vmatpush.bf16.msra.mxu0 0
        %741 = vmatpush.bf16.msra.mxu0 %v726
        %742 = vmatmul.bf16.gmra.mxu0 %v723
        %v743 = vpop.f32.mrf.mxu0
        %v744 = vadd.f32 %v681, %v743
        %v745 = vpop.f32.mrf.mxu0
        %746 = vdwg.mxu0
        %747 = vmatpush.bf16.msra.mxu0 0
        %748 = vmatpush.bf16.msra.mxu0 0
        %749 = vmatpush.bf16.msra.mxu0 0
        %750 = vmatpush.bf16.msra.mxu0 0
        %751 = vmatpush.bf16.msra.mxu0 0
        %752 = vmatpush.bf16.msra.mxu0 0
        %753 = vmatpush.bf16.msra.mxu0 0
        %754 = vmatpush.bf16.msra.mxu0 %v729
        %755 = vmatmul.bf16.gmra.mxu0 %v723
        %v756 = vpop.f32.mrf.mxu0
        %v757 = vadd.f32 %v694, %v756
        %v758 = vpop.f32.mrf.mxu0
        %759 = vdwg.mxu0
        %760 = vmatpush.bf16.msra.mxu0 0
        %761 = vmatpush.bf16.msra.mxu0 0
        %762 = vmatpush.bf16.msra.mxu0 0
        %763 = vmatpush.bf16.msra.mxu0 0
        %764 = vmatpush.bf16.msra.mxu0 0
        %765 = vmatpush.bf16.msra.mxu0 0
        %766 = vmatpush.bf16.msra.mxu0 0
        %767 = vmatpush.bf16.msra.mxu0 %v732
        %768 = vmatmul.bf16.gmra.mxu0 %v723
        %v769 = vpop.f32.mrf.mxu0
        %v770 = vadd.f32 %v707, %v769
        %v771 = vpop.f32.mrf.mxu0
        %772 = vdwg.mxu0
        %v773 = vld [vmem:[%s235] sm:$0x3f]
        %v774 = vunpack.c.l.bf16 %v773
        %v775 = vunpack.c.h.bf16 %v773
        %v776 = vmax.f32 %v774, 0.0
        %v777 = vmax.f32 %v775, 0.0
        %780 = vst [vmem:[#allocation1] ss:$2 sm:$0xff] %v776
        %s781 = scalar_lea.vmem [#allocation1], 16
        %782 = vst [vmem:[%s781] ss:$2 sm:$0xff] %v777
        %v783 = vld.sshfl [vmem:[#allocation1] sm:$0xff pattern:$0x75316420]
        %v784 = vld.sshfl [vmem:[#allocation1 + $0x8] sm:$0xff pattern:$0x75316420]
        %v785 = vld.sshfl [vmem:[#allocation1 + $0x10] sm:$0xff pattern:$0x75316420]
        %v789 = vpack.c.bf16 %v783, %v783
        %v790 = vpack.c.bf16 %v784, %v784
        %v791 = vpack.c.bf16 %v785, %v785
        %s792 = scalar_lea.vmem %s1, 24
        %v793 = vld [vmem:[%s792] sm:$0xf]
        %797 = vrot.lane.b32.xlu0 %v789, 126
        %v798 = vpop.permute.xlu0 %797
        %799 = vrot.lane.b32.xlu0 %v790, 126
        %v800 = vpop.permute.xlu0 %799
        %801 = vrot.lane.b32.xlu0 %v791, 126
        %v802 = vpop.permute.xlu0 %801
        %vm803 = vcmask 1031168
        %v804 = vsel %vm803, %v798, %v800
        %v805 = vsel %vm803, %v800, %v802
        %v807 = vsel %vm299, %v793, 0
        %v810 = vsel %vm303, %v804, 0
        %v813 = vsel %vm303, %v805, 0
        %v816 = vsel %vm303, %v802, 0
        %818 = vmatpush.bf16.msra.mxu0 0
        %819 = vmatpush.bf16.msra.mxu0 0
        %820 = vmatpush.bf16.msra.mxu0 0
        %821 = vmatpush.bf16.msra.mxu0 0
        %822 = vmatpush.bf16.msra.mxu0 0
        %823 = vmatpush.bf16.msra.mxu0 0
        %824 = vmatpush.bf16.msra.mxu0 0
        %825 = vmatpush.bf16.msra.mxu0 %v810
        %826 = vmatmul.bf16.gmra.mxu0 %v807
        %v827 = vpop.f32.mrf.mxu0
        %v828 = vadd.f32 0.0, %v827
        %v829 = vpop.f32.mrf.mxu0
        %830 = vdwg.mxu0
        %831 = vmatpush.bf16.msra.mxu0 0
        %832 = vmatpush.bf16.msra.mxu0 0
        %833 = vmatpush.bf16.msra.mxu0 0
        %834 = vmatpush.bf16.msra.mxu0 0
        %835 = vmatpush.bf16.msra.mxu0 0
        %836 = vmatpush.bf16.msra.mxu0 0
        %837 = vmatpush.bf16.msra.mxu0 0
        %838 = vmatpush.bf16.msra.mxu0 %v813
        %839 = vmatmul.bf16.gmra.mxu0 %v807
        %v840 = vpop.f32.mrf.mxu0
        %v841 = vadd.f32 0.0, %v840
        %v842 = vpop.f32.mrf.mxu0
        %843 = vdwg.mxu0
        %844 = vmatpush.bf16.msra.mxu0 0
        %845 = vmatpush.bf16.msra.mxu0 0
        %846 = vmatpush.bf16.msra.mxu0 0
        %847 = vmatpush.bf16.msra.mxu0 0
        %848 = vmatpush.bf16.msra.mxu0 0
        %849 = vmatpush.bf16.msra.mxu0 0
        %850 = vmatpush.bf16.msra.mxu0 0
        %851 = vmatpush.bf16.msra.mxu0 %v816
        %852 = vmatmul.bf16.gmra.mxu0 %v807
        %v853 = vpop.f32.mrf.mxu0
        %v854 = vadd.f32 0.0, %v853
        %v855 = vpop.f32.mrf.mxu0
        %856 = vdwg.mxu0
        %v857 = vadd.f32 %v744, %v828
        %v858 = vadd.f32 %v757, %v841
        %v859 = vadd.f32 %v770, %v854
        %v860 = vld [vmem:[%s235] sm:$0x3f]
        %v861 = vunpack.c.l.bf16 %v860
        %v862 = vunpack.c.h.bf16 %v860
        %v863 = vmax.f32 %v861, 0.0
        %v864 = vmax.f32 %v862, 0.0
        %867 = vst [vmem:[#allocation1] ss:$2 sm:$0xff] %v863
        %s868 = scalar_lea.vmem [#allocation1], 16
        %869 = vst [vmem:[%s868] ss:$2 sm:$0xff] %v864
        %v870 = vld.sshfl [vmem:[#allocation1] sm:$0xff pattern:$0x75316420]
        %v871 = vld.sshfl [vmem:[#allocation1 + $0x8] sm:$0xff pattern:$0x75316420]
        %v872 = vld.sshfl [vmem:[#allocation1 + $0x10] sm:$0xff pattern:$0x75316420]
        %v876 = vpack.c.bf16 %v870, %v870
        %v877 = vpack.c.bf16 %v871, %v871
        %v878 = vpack.c.bf16 %v872, %v872
        %s879 = scalar_lea.vmem %s1, 28
        %v880 = vld [vmem:[%s879] sm:$0xf]
        %884 = vrot.lane.b32.xlu0 %v876, 127
        %v885 = vpop.permute.xlu0 %884
        %886 = vrot.lane.b32.xlu0 %v877, 127
        %v887 = vpop.permute.xlu0 %886
        %888 = vrot.lane.b32.xlu0 %v878, 127
        %v889 = vpop.permute.xlu0 %888
        %v890 = vsel %vm445, %v885, %v887
        %v891 = vsel %vm445, %v887, %v889
        %v893 = vsel %vm299, %v880, 0
        %v896 = vsel %vm303, %v890, 0
        %v899 = vsel %vm303, %v891, 0
        %v902 = vsel %vm303, %v889, 0
        %904 = vmatpush.bf16.msra.mxu0 0
        %905 = vmatpush.bf16.msra.mxu0 0
        %906 = vmatpush.bf16.msra.mxu0 0
        %907 = vmatpush.bf16.msra.mxu0 0
        %908 = vmatpush.bf16.msra.mxu0 0
        %909 = vmatpush.bf16.msra.mxu0 0
        %910 = vmatpush.bf16.msra.mxu0 0
        %911 = vmatpush.bf16.msra.mxu0 %v896
        %912 = vmatmul.bf16.gmra.mxu0 %v893
        %v913 = vpop.f32.mrf.mxu0
        %v914 = vadd.f32 0.0, %v913
        %v915 = vpop.f32.mrf.mxu0
        %916 = vdwg.mxu0
        %917 = vmatpush.bf16.msra.mxu0 0
        %918 = vmatpush.bf16.msra.mxu0 0
        %919 = vmatpush.bf16.msra.mxu0 0
        %920 = vmatpush.bf16.msra.mxu0 0
        %921 = vmatpush.bf16.msra.mxu0 0
        %922 = vmatpush.bf16.msra.mxu0 0
        %923 = vmatpush.bf16.msra.mxu0 0
        %924 = vmatpush.bf16.msra.mxu0 %v899
        %925 = vmatmul.bf16.gmra.mxu0 %v893
        %v926 = vpop.f32.mrf.mxu0
        %v927 = vadd.f32 0.0, %v926
        %v928 = vpop.f32.mrf.mxu0
        %929 = vdwg.mxu0
        %930 = vmatpush.bf16.msra.mxu0 0
        %931 = vmatpush.bf16.msra.mxu0 0
        %932 = vmatpush.bf16.msra.mxu0 0
        %933 = vmatpush.bf16.msra.mxu0 0
        %934 = vmatpush.bf16.msra.mxu0 0
        %935 = vmatpush.bf16.msra.mxu0 0
        %936 = vmatpush.bf16.msra.mxu0 0
        %937 = vmatpush.bf16.msra.mxu0 %v902
        %938 = vmatmul.bf16.gmra.mxu0 %v893
        %v939 = vpop.f32.mrf.mxu0
        %v940 = vadd.f32 0.0, %v939
        %v941 = vpop.f32.mrf.mxu0
        %942 = vdwg.mxu0
        %v943 = vadd.f32 %v857, %v914
        %v944 = vadd.f32 %v858, %v927
        %v945 = vadd.f32 %v859, %v940
        %s946 = scalar_lea.vmem %s218, 24 [#allocation2]
        %947 = vst [vmem:[%s946] sm:$0xff] %v943
        %948 = vst [vmem:[%s946 + $0x8] sm:$0xff] %v944
        %949 = vst.msk [vmem:[%s946 + $0x10] sm:$0xff] %vm579, %v945
        %v950 = vmul.f32 %v943, %v582
        %v951 = vmul.f32 %v944, %v583
        %v952 = vmul.f32 %v945, %v584
        %v953 = vadd.f32 %v950, %v951
        %v954 = vsel %vm579, %v952, 0.0
        %v955 = vadd.f32 %v953, %v954
        %956 = vadd.xlane.f32.xlu0 %v955
        %v957 = vpop.xlane.xlu0 %956
        %v958 = vadd.f32 %v596, %v957
        %v959 = vmul.f32 %v950, %v943
        %v960 = vmul.f32 %v951, %v944
        %v961 = vmul.f32 %v952, %v945
        %v962 = vadd.f32 %v959, %v960
        %v963 = vsel %vm579, %v961, 0.0
        %v964 = vadd.f32 %v962, %v963
        %965 = vadd.xlane.f32.xlu0 %v964
        %v966 = vpop.xlane.xlu0 %965
        %v967 = vadd.f32 %v605, %v966
        %v968 = vld [vmem:[%s235] sm:$0x3f]
        %v969 = vunpack.c.l.bf16 %v968
        %v970 = vunpack.c.h.bf16 %v968
        %v971 = vmax.f32 %v969, 0.0
        %v972 = vmax.f32 %v970, 0.0
        %975 = vst [vmem:[#allocation1] ss:$2 sm:$0xff] %v971
        %s976 = scalar_lea.vmem [#allocation1], 16
        %977 = vst [vmem:[%s976] ss:$2 sm:$0xff] %v972
        %v978 = vld.sshfl [vmem:[#allocation1] sm:$0xff pattern:$0x75316420]
        %v979 = vld.sshfl [vmem:[#allocation1 + $0x8] sm:$0xff pattern:$0x75316420]
        %v980 = vld.sshfl [vmem:[#allocation1 + $0x10] sm:$0xff pattern:$0x75316420]
        %v984 = vpack.c.bf16 %v978, %v978
        %v985 = vpack.c.bf16 %v979, %v979
        %v986 = vpack.c.bf16 %v980, %v980
        %s987 = scalar_lea.vmem %s1, 32
        %v988 = vld [vmem:[%s987] sm:$0xf]
        %v989 = vld [vmem:[%s235] sm:$0x3f]
        %v990 = vunpack.c.l.bf16 %v989
        %v991 = vunpack.c.h.bf16 %v989
        %v992 = vmax.f32 %v990, 0.0
        %v993 = vmax.f32 %v991, 0.0
        %996 = vst [vmem:[#allocation1] ss:$2 sm:$0xff] %v992
        %s997 = scalar_lea.vmem [#allocation1], 16
        %998 = vst [vmem:[%s997] ss:$2 sm:$0xff] %v993
        %v999 = vld.sshfl [vmem:[#allocation1] sm:$0xff pattern:$0x75316420]
        %v1000 = vld.sshfl [vmem:[#allocation1 + $0x8] sm:$0xff pattern:$0x75316420]
        %v1001 = vld.sshfl [vmem:[#allocation1 + $0x10] sm:$0xff pattern:$0x75316420]
        %v1005 = vpack.c.bf16 %v999, %v999
        %v1006 = vpack.c.bf16 %v1000, %v1000
        %v1007 = vpack.c.bf16 %v1001, %v1001
        %s1008 = scalar_lea.vmem %s1, 36
        %v1009 = vld [vmem:[%s1008] sm:$0xf]
        %1013 = vrot.lane.b32.xlu0 %v1005, 92
        %v1014 = vpop.permute.xlu0 %1013
        %1015 = vrot.lane.b32.xlu0 %v1006, 92
        %v1016 = vpop.permute.xlu0 %1015
        %1017 = vrot.lane.b32.xlu0 %v1007, 92
        %v1018 = vpop.permute.xlu0 %1017
        %vm1019 = vcmask 752640
        %v1020 = vsel %vm1019, %v1014, %v1016
        %v1021 = vsel %vm1019, %v1016, %v1018
        %v1023 = vsel %vm299, %v1009, 0
        %v1026 = vsel %vm303, %v1020, 0
        %v1029 = vsel %vm303, %v1021, 0
        %v1032 = vsel %vm303, %v1018, 0
        %1034 = vmatpush.bf16.msra.mxu0 0
        %1035 = vmatpush.bf16.msra.mxu0 0
        %1036 = vmatpush.bf16.msra.mxu0 0
        %1037 = vmatpush.bf16.msra.mxu0 0
        %1038 = vmatpush.bf16.msra.mxu0 0
        %1039 = vmatpush.bf16.msra.mxu0 0
        %1040 = vmatpush.bf16.msra.mxu0 0
        %1041 = vmatpush.bf16.msra.mxu0 %v1026
        %1042 = vmatmul.bf16.gmra.mxu0 %v1023
        %v1043 = vpop.f32.mrf.mxu0
        %v1044 = vadd.f32 0.0, %v1043
        %v1045 = vpop.f32.mrf.mxu0
        %1046 = vdwg.mxu0
        %1047 = vmatpush.bf16.msra.mxu0 0
        %1048 = vmatpush.bf16.msra.mxu0 0
        %1049 = vmatpush.bf16.msra.mxu0 0
        %1050 = vmatpush.bf16.msra.mxu0 0
        %1051 = vmatpush.bf16.msra.mxu0 0
        %1052 = vmatpush.bf16.msra.mxu0 0
        %1053 = vmatpush.bf16.msra.mxu0 0
        %1054 = vmatpush.bf16.msra.mxu0 %v1029
        %1055 = vmatmul.bf16.gmra.mxu0 %v1023
        %v1056 = vpop.f32.mrf.mxu0
        %v1057 = vadd.f32 0.0, %v1056
        %v1058 = vpop.f32.mrf.mxu0
        %1059 = vdwg.mxu0
        %1060 = vmatpush.bf16.msra.mxu0 0
        %1061 = vmatpush.bf16.msra.mxu0 0
        %1062 = vmatpush.bf16.msra.mxu0 0
        %1063 = vmatpush.bf16.msra.mxu0 0
        %1064 = vmatpush.bf16.msra.mxu0 0
        %1065 = vmatpush.bf16.msra.mxu0 0
        %1066 = vmatpush.bf16.msra.mxu0 0
        %1067 = vmatpush.bf16.msra.mxu0 %v1032
        %1068 = vmatmul.bf16.gmra.mxu0 %v1023
        %v1069 = vpop.f32.mrf.mxu0
        %v1070 = vadd.f32 0.0, %v1069
        %v1071 = vpop.f32.mrf.mxu0
        %1072 = vdwg.mxu0
        %1076 = vrot.lane.b32.xlu0 %v984, 91
        %v1077 = vpop.permute.xlu0 %1076
        %1078 = vrot.lane.b32.xlu0 %v985, 91
        %v1079 = vpop.permute.xlu0 %1078
        %1080 = vrot.lane.b32.xlu0 %v986, 91
        %v1081 = vpop.permute.xlu0 %1080
        %vm1082 = vcmask 744448
        %v1083 = vsel %vm1082, %v1077, %v1079
        %v1084 = vsel %vm1082, %v1079, %v1081
        %v1086 = vsel %vm299, %v988, 0
        %v1089 = vsel %vm303, %v1083, 0
        %v1092 = vsel %vm303, %v1084, 0
        %v1095 = vsel %vm303, %v1081, 0
        %1097 = vmatpush.bf16.msra.mxu0 0
        %1098 = vmatpush.bf16.msra.mxu0 0
        %1099 = vmatpush.bf16.msra.mxu0 0
        %1100 = vmatpush.bf16.msra.mxu0 0
        %1101 = vmatpush.bf16.msra.mxu0 0
        %1102 = vmatpush.bf16.msra.mxu0 0
        %1103 = vmatpush.bf16.msra.mxu0 0
        %1104 = vmatpush.bf16.msra.mxu0 %v1089
        %1105 = vmatmul.bf16.gmra.mxu0 %v1086
        %v1106 = vpop.f32.mrf.mxu0
        %v1107 = vadd.f32 %v1044, %v1106
        %v1108 = vpop.f32.mrf.mxu0
        %1109 = vdwg.mxu0
        %1110 = vmatpush.bf16.msra.mxu0 0
        %1111 = vmatpush.bf16.msra.mxu0 0
        %1112 = vmatpush.bf16.msra.mxu0 0
        %1113 = vmatpush.bf16.msra.mxu0 0
        %1114 = vmatpush.bf16.msra.mxu0 0
        %1115 = vmatpush.bf16.msra.mxu0 0
        %1116 = vmatpush.bf16.msra.mxu0 0
        %1117 = vmatpush.bf16.msra.mxu0 %v1092
        %1118 = vmatmul.bf16.gmra.mxu0 %v1086
        %v1119 = vpop.f32.mrf.mxu0
        %v1120 = vadd.f32 %v1057, %v1119
        %v1121 = vpop.f32.mrf.mxu0
        %1122 = vdwg.mxu0
        %1123 = vmatpush.bf16.msra.mxu0 0
        %1124 = vmatpush.bf16.msra.mxu0 0
        %1125 = vmatpush.bf16.msra.mxu0 0
        %1126 = vmatpush.bf16.msra.mxu0 0
        %1127 = vmatpush.bf16.msra.mxu0 0
        %1128 = vmatpush.bf16.msra.mxu0 0
        %1129 = vmatpush.bf16.msra.mxu0 0
        %1130 = vmatpush.bf16.msra.mxu0 %v1095
        %1131 = vmatmul.bf16.gmra.mxu0 %v1086
        %v1132 = vpop.f32.mrf.mxu0
        %v1133 = vadd.f32 %v1070, %v1132
        %v1134 = vpop.f32.mrf.mxu0
        %1135 = vdwg.mxu0
        %v1136 = vld [vmem:[%s235] sm:$0x3f]
        %v1137 = vunpack.c.l.bf16 %v1136
        %v1138 = vunpack.c.h.bf16 %v1136
        %v1139 = vmax.f32 %v1137, 0.0
        %v1140 = vmax.f32 %v1138, 0.0
        %1143 = vst [vmem:[#allocation1] ss:$2 sm:$0xff] %v1139
        %s1144 = scalar_lea.vmem [#allocation1], 16
        %1145 = vst [vmem:[%s1144] ss:$2 sm:$0xff] %v1140
        %v1146 = vld.sshfl [vmem:[#allocation1] sm:$0xff pattern:$0x75316420]
        %v1147 = vld.sshfl [vmem:[#allocation1 + $0x8] sm:$0xff pattern:$0x75316420]
        %v1148 = vld.sshfl [vmem:[#allocation1 + $0x10] sm:$0xff pattern:$0x75316420]
        %v1152 = vpack.c.bf16 %v1146, %v1146
        %v1153 = vpack.c.bf16 %v1147, %v1147
        %v1154 = vpack.c.bf16 %v1148, %v1148
        %s1155 = scalar_lea.vmem %s1, 40
        %v1156 = vld [vmem:[%s1155] sm:$0xf]
        %1160 = vrot.lane.b32.xlu0 %v1152, 109
        %v1161 = vpop.permute.xlu0 %1160
        %1162 = vrot.lane.b32.xlu0 %v1153, 109
        %v1163 = vpop.permute.xlu0 %1162
        %1164 = vrot.lane.b32.xlu0 %v1154, 109
        %v1165 = vpop.permute.xlu0 %1164
        %v1166 = vsel %vm361, %v1161, %v1163
        %v1167 = vsel %vm361, %v1163, %v1165
        %v1169 = vsel %vm299, %v1156, 0
        %v1172 = vsel %vm303, %v1166, 0
        %v1175 = vsel %vm303, %v1167, 0
        %v1178 = vsel %vm303, %v1165, 0
        %1180 = vmatpush.bf16.msra.mxu0 0
        %1181 = vmatpush.bf16.msra.mxu0 0
        %1182 = vmatpush.bf16.msra.mxu0 0
        %1183 = vmatpush.bf16.msra.mxu0 0
        %1184 = vmatpush.bf16.msra.mxu0 0
        %1185 = vmatpush.bf16.msra.mxu0 0
        %1186 = vmatpush.bf16.msra.mxu0 0
        %1187 = vmatpush.bf16.msra.mxu0 %v1172
        %1188 = vmatmul.bf16.gmra.mxu0 %v1169
        %v1189 = vpop.f32.mrf.mxu0
        %v1190 = vadd.f32 0.0, %v1189
        %v1191 = vpop.f32.mrf.mxu0
        %1192 = vdwg.mxu0
        %1193 = vmatpush.bf16.msra.mxu0 0
        %1194 = vmatpush.bf16.msra.mxu0 0
        %1195 = vmatpush.bf16.msra.mxu0 0
        %1196 = vmatpush.bf16.msra.mxu0 0
        %1197 = vmatpush.bf16.msra.mxu0 0
        %1198 = vmatpush.bf16.msra.mxu0 0
        %1199 = vmatpush.bf16.msra.mxu0 0
        %1200 = vmatpush.bf16.msra.mxu0 %v1175
        %1201 = vmatmul.bf16.gmra.mxu0 %v1169
        %v1202 = vpop.f32.mrf.mxu0
        %v1203 = vadd.f32 0.0, %v1202
        %v1204 = vpop.f32.mrf.mxu0
        %1205 = vdwg.mxu0
        %1206 = vmatpush.bf16.msra.mxu0 0
        %1207 = vmatpush.bf16.msra.mxu0 0
        %1208 = vmatpush.bf16.msra.mxu0 0
        %1209 = vmatpush.bf16.msra.mxu0 0
        %1210 = vmatpush.bf16.msra.mxu0 0
        %1211 = vmatpush.bf16.msra.mxu0 0
        %1212 = vmatpush.bf16.msra.mxu0 0
        %1213 = vmatpush.bf16.msra.mxu0 %v1178
        %1214 = vmatmul.bf16.gmra.mxu0 %v1169
        %v1215 = vpop.f32.mrf.mxu0
        %v1216 = vadd.f32 0.0, %v1215
        %v1217 = vpop.f32.mrf.mxu0
        %1218 = vdwg.mxu0
        %v1219 = vadd.f32 %v1107, %v1190
        %v1220 = vadd.f32 %v1120, %v1203
        %v1221 = vadd.f32 %v1133, %v1216
        %v1222 = vld [vmem:[%s235] sm:$0x3f]
        %v1223 = vunpack.c.l.bf16 %v1222
        %v1224 = vunpack.c.h.bf16 %v1222
        %v1225 = vmax.f32 %v1223, 0.0
        %v1226 = vmax.f32 %v1224, 0.0
        %1229 = vst [vmem:[#allocation1] ss:$2 sm:$0xff] %v1225
        %s1230 = scalar_lea.vmem [#allocation1], 16
        %1231 = vst [vmem:[%s1230] ss:$2 sm:$0xff] %v1226
        %v1232 = vld.sshfl [vmem:[#allocation1] sm:$0xff pattern:$0x75316420]
        %v1233 = vld.sshfl [vmem:[#allocation1 + $0x8] sm:$0xff pattern:$0x75316420]
        %v1234 = vld.sshfl [vmem:[#allocation1 + $0x10] sm:$0xff pattern:$0x75316420]
        %v1238 = vpack.c.bf16 %v1232, %v1232
        %v1239 = vpack.c.bf16 %v1233, %v1233
        %v1240 = vpack.c.bf16 %v1234, %v1234
        %s1241 = scalar_lea.vmem %s1, 44
        %v1242 = vld [vmem:[%s1241] sm:$0xf]
        %1246 = vrot.lane.b32.xlu0 %v1238, 110
        %v1247 = vpop.permute.xlu0 %1246
        %1248 = vrot.lane.b32.xlu0 %v1239, 110
        %v1249 = vpop.permute.xlu0 %1248
        %1250 = vrot.lane.b32.xlu0 %v1240, 110
        %v1251 = vpop.permute.xlu0 %1250
        %v1252 = vsel %vm296, %v1247, %v1249
        %v1253 = vsel %vm296, %v1249, %v1251
        %v1255 = vsel %vm299, %v1242, 0
        %v1258 = vsel %vm303, %v1252, 0
        %v1261 = vsel %vm303, %v1253, 0
        %v1264 = vsel %vm303, %v1251, 0
        %1266 = vmatpush.bf16.msra.mxu0 0
        %1267 = vmatpush.bf16.msra.mxu0 0
        %1268 = vmatpush.bf16.msra.mxu0 0
        %1269 = vmatpush.bf16.msra.mxu0 0
        %1270 = vmatpush.bf16.msra.mxu0 0
        %1271 = vmatpush.bf16.msra.mxu0 0
        %1272 = vmatpush.bf16.msra.mxu0 0
        %1273 = vmatpush.bf16.msra.mxu0 %v1258
        %1274 = vmatmul.bf16.gmra.mxu0 %v1255
        %v1275 = vpop.f32.mrf.mxu0
        %v1276 = vadd.f32 0.0, %v1275
        %v1277 = vpop.f32.mrf.mxu0
        %1278 = vdwg.mxu0
        %1279 = vmatpush.bf16.msra.mxu0 0
        %1280 = vmatpush.bf16.msra.mxu0 0
        %1281 = vmatpush.bf16.msra.mxu0 0
        %1282 = vmatpush.bf16.msra.mxu0 0
        %1283 = vmatpush.bf16.msra.mxu0 0
        %1284 = vmatpush.bf16.msra.mxu0 0
        %1285 = vmatpush.bf16.msra.mxu0 0
        %1286 = vmatpush.bf16.msra.mxu0 %v1261
        %1287 = vmatmul.bf16.gmra.mxu0 %v1255
        %v1288 = vpop.f32.mrf.mxu0
        %v1289 = vadd.f32 0.0, %v1288
        %v1290 = vpop.f32.mrf.mxu0
        %1291 = vdwg.mxu0
        %1292 = vmatpush.bf16.msra.mxu0 0
        %1293 = vmatpush.bf16.msra.mxu0 0
        %1294 = vmatpush.bf16.msra.mxu0 0
        %1295 = vmatpush.bf16.msra.mxu0 0
        %1296 = vmatpush.bf16.msra.mxu0 0
        %1297 = vmatpush.bf16.msra.mxu0 0
        %1298 = vmatpush.bf16.msra.mxu0 0
        %1299 = vmatpush.bf16.msra.mxu0 %v1264
        %1300 = vmatmul.bf16.gmra.mxu0 %v1255
        %v1301 = vpop.f32.mrf.mxu0
        %v1302 = vadd.f32 0.0, %v1301
        %v1303 = vpop.f32.mrf.mxu0
        %1304 = vdwg.mxu0
        %v1305 = vadd.f32 %v1219, %v1276
        %v1306 = vadd.f32 %v1220, %v1289
        %v1307 = vadd.f32 %v1221, %v1302
        %s1308 = scalar_lea.vmem %s218, 48 [#allocation2]
        %1309 = vst [vmem:[%s1308] sm:$0xff] %v1305
        %1310 = vst [vmem:[%s1308 + $0x8] sm:$0xff] %v1306
        %1311 = vst.msk [vmem:[%s1308 + $0x10] sm:$0xff] %vm579, %v1307
        %v1312 = vmul.f32 %v1305, %v582
        %v1313 = vmul.f32 %v1306, %v583
        %v1314 = vmul.f32 %v1307, %v584
        %v1315 = vadd.f32 %v1312, %v1313
        %v1316 = vsel %vm579, %v1314, 0.0
        %v1317 = vadd.f32 %v1315, %v1316
        %1318 = vadd.xlane.f32.xlu0 %v1317
        %v1319 = vpop.xlane.xlu0 %1318
        %v1320 = vadd.f32 %v958, %v1319
        %v1321 = vmul.f32 %v1312, %v1305
        %v1322 = vmul.f32 %v1313, %v1306
        %v1323 = vmul.f32 %v1314, %v1307
        %v1324 = vadd.f32 %v1321, %v1322
        %v1325 = vsel %vm579, %v1323, 0.0
        %v1326 = vadd.f32 %v1324, %v1325
        %1327 = vadd.xlane.f32.xlu0 %v1326
        %v1328 = vpop.xlane.xlu0 %1327
        %v1329 = vadd.f32 %v967, %v1328
        %v1330 = vld [vmem:[%s235] sm:$0x3f]
        %v1331 = vunpack.c.l.bf16 %v1330
        %v1332 = vunpack.c.h.bf16 %v1330
        %v1333 = vmax.f32 %v1331, 0.0
        %v1334 = vmax.f32 %v1332, 0.0
        %1337 = vst [vmem:[#allocation1] ss:$2 sm:$0xff] %v1333
        %s1338 = scalar_lea.vmem [#allocation1], 16
        %1339 = vst [vmem:[%s1338] ss:$2 sm:$0xff] %v1334
        %v1340 = vld.sshfl [vmem:[#allocation1] sm:$0xff pattern:$0x75316420]
        %v1341 = vld.sshfl [vmem:[#allocation1 + $0x8] sm:$0xff pattern:$0x75316420]
        %v1342 = vld.sshfl [vmem:[#allocation1 + $0x10] sm:$0xff pattern:$0x75316420]
        %v1346 = vpack.c.bf16 %v1340, %v1340
        %v1347 = vpack.c.bf16 %v1341, %v1341
        %v1348 = vpack.c.bf16 %v1342, %v1342
        %s1349 = scalar_lea.vmem %s1, 48
        %v1350 = vld [vmem:[%s1349] sm:$0xf]
        %v1351 = vld [vmem:[%s235] sm:$0x3f]
        %v1352 = vunpack.c.l.bf16 %v1351
        %v1353 = vunpack.c.h.bf16 %v1351
        %v1354 = vmax.f32 %v1352, 0.0
        %v1355 = vmax.f32 %v1353, 0.0
        %1358 = vst [vmem:[#allocation1] ss:$2 sm:$0xff] %v1354
        %s1359 = scalar_lea.vmem [#allocation1], 16
        %1360 = vst [vmem:[%s1359] ss:$2 sm:$0xff] %v1355
        %v1361 = vld.sshfl [vmem:[#allocation1] sm:$0xff pattern:$0x75316420]
        %v1362 = vld.sshfl [vmem:[#allocation1 + $0x8] sm:$0xff pattern:$0x75316420]
        %v1363 = vld.sshfl [vmem:[#allocation1 + $0x10] sm:$0xff pattern:$0x75316420]
        %v1367 = vpack.c.bf16 %v1361, %v1361
        %v1368 = vpack.c.bf16 %v1362, %v1362
        %v1369 = vpack.c.bf16 %v1363, %v1363
        %s1370 = scalar_lea.vmem %s1, 52
        %v1371 = vld [vmem:[%s1370] sm:$0xf]
        %1375 = vrot.lane.b32.xlu0 %v1367, 91
        %v1376 = vpop.permute.xlu0 %1375
        %1377 = vrot.lane.b32.xlu0 %v1368, 91
        %v1378 = vpop.permute.xlu0 %1377
        %1379 = vrot.lane.b32.xlu0 %v1369, 91
        %v1380 = vpop.permute.xlu0 %1379
        %v1381 = vsel %vm1082, %v1376, %v1378
        %v1382 = vsel %vm1082, %v1378, %v1380
        %v1384 = vsel %vm299, %v1371, 0
        %v1387 = vsel %vm303, %v1381, 0
        %v1390 = vsel %vm303, %v1382, 0
        %v1393 = vsel %vm303, %v1380, 0
        %1395 = vmatpush.bf16.msra.mxu0 0
        %1396 = vmatpush.bf16.msra.mxu0 0
        %1397 = vmatpush.bf16.msra.mxu0 0
        %1398 = vmatpush.bf16.msra.mxu0 0
        %1399 = vmatpush.bf16.msra.mxu0 0
        %1400 = vmatpush.bf16.msra.mxu0 0
        %1401 = vmatpush.bf16.msra.mxu0 0
        %1402 = vmatpush.bf16.msra.mxu0 %v1387
        %1403 = vmatmul.bf16.gmra.mxu0 %v1384
        %v1404 = vpop.f32.mrf.mxu0
        %v1405 = vadd.f32 0.0, %v1404
        %v1406 = vpop.f32.mrf.mxu0
        %1407 = vdwg.mxu0
        %1408 = vmatpush.bf16.msra.mxu0 0
        %1409 = vmatpush.bf16.msra.mxu0 0
        %1410 = vmatpush.bf16.msra.mxu0 0
        %1411 = vmatpush.bf16.msra.mxu0 0
        %1412 = vmatpush.bf16.msra.mxu0 0
        %1413 = vmatpush.bf16.msra.mxu0 0
        %1414 = vmatpush.bf16.msra.mxu0 0
        %1415 = vmatpush.bf16.msra.mxu0 %v1390
        %1416 = vmatmul.bf16.gmra.mxu0 %v1384
        %v1417 = vpop.f32.mrf.mxu0
        %v1418 = vadd.f32 0.0, %v1417
        %v1419 = vpop.f32.mrf.mxu0
        %1420 = vdwg.mxu0
        %1421 = vmatpush.bf16.msra.mxu0 0
        %1422 = vmatpush.bf16.msra.mxu0 0
        %1423 = vmatpush.bf16.msra.mxu0 0
        %1424 = vmatpush.bf16.msra.mxu0 0
        %1425 = vmatpush.bf16.msra.mxu0 0
        %1426 = vmatpush.bf16.msra.mxu0 0
        %1427 = vmatpush.bf16.msra.mxu0 0
        %1428 = vmatpush.bf16.msra.mxu0 %v1393
        %1429 = vmatmul.bf16.gmra.mxu0 %v1384
        %v1430 = vpop.f32.mrf.mxu0
        %v1431 = vadd.f32 0.0, %v1430
        %v1432 = vpop.f32.mrf.mxu0
        %1433 = vdwg.mxu0
        %1437 = vrot.lane.b32.xlu0 %v1346, 90
        %v1438 = vpop.permute.xlu0 %1437
        %1439 = vrot.lane.b32.xlu0 %v1347, 90
        %v1440 = vpop.permute.xlu0 %1439
        %1441 = vrot.lane.b32.xlu0 %v1348, 90
        %v1442 = vpop.permute.xlu0 %1441
        %vm1443 = vcmask 736256
        %v1444 = vsel %vm1443, %v1438, %v1440
        %v1445 = vsel %vm1443, %v1440, %v1442
        %v1447 = vsel %vm299, %v1350, 0
        %v1450 = vsel %vm303, %v1444, 0
        %v1453 = vsel %vm303, %v1445, 0
        %v1456 = vsel %vm303, %v1442, 0
        %1458 = vmatpush.bf16.msra.mxu0 0
        %1459 = vmatpush.bf16.msra.mxu0 0
        %1460 = vmatpush.bf16.msra.mxu0 0
        %1461 = vmatpush.bf16.msra.mxu0 0
        %1462 = vmatpush.bf16.msra.mxu0 0
        %1463 = vmatpush.bf16.msra.mxu0 0
        %1464 = vmatpush.bf16.msra.mxu0 0
        %1465 = vmatpush.bf16.msra.mxu0 %v1450
        %1466 = vmatmul.bf16.gmra.mxu0 %v1447
        %v1467 = vpop.f32.mrf.mxu0
        %v1468 = vadd.f32 %v1405, %v1467
        %v1469 = vpop.f32.mrf.mxu0
        %1470 = vdwg.mxu0
        %1471 = vmatpush.bf16.msra.mxu0 0
        %1472 = vmatpush.bf16.msra.mxu0 0
        %1473 = vmatpush.bf16.msra.mxu0 0
        %1474 = vmatpush.bf16.msra.mxu0 0
        %1475 = vmatpush.bf16.msra.mxu0 0
        %1476 = vmatpush.bf16.msra.mxu0 0
        %1477 = vmatpush.bf16.msra.mxu0 0
        %1478 = vmatpush.bf16.msra.mxu0 %v1453
        %1479 = vmatmul.bf16.gmra.mxu0 %v1447
        %v1480 = vpop.f32.mrf.mxu0
        %v1481 = vadd.f32 %v1418, %v1480
        %v1482 = vpop.f32.mrf.mxu0
        %1483 = vdwg.mxu0
        %1484 = vmatpush.bf16.msra.mxu0 0
        %1485 = vmatpush.bf16.msra.mxu0 0
        %1486 = vmatpush.bf16.msra.mxu0 0
        %1487 = vmatpush.bf16.msra.mxu0 0
        %1488 = vmatpush.bf16.msra.mxu0 0
        %1489 = vmatpush.bf16.msra.mxu0 0
        %1490 = vmatpush.bf16.msra.mxu0 0
        %1491 = vmatpush.bf16.msra.mxu0 %v1456
        %1492 = vmatmul.bf16.gmra.mxu0 %v1447
        %v1493 = vpop.f32.mrf.mxu0
        %v1494 = vadd.f32 %v1431, %v1493
        %v1495 = vpop.f32.mrf.mxu0
        %1496 = vdwg.mxu0
        %v1497 = vld [vmem:[%s235] sm:$0x3f]
        %v1498 = vunpack.c.l.bf16 %v1497
        %v1499 = vunpack.c.h.bf16 %v1497
        %v1500 = vmax.f32 %v1498, 0.0
        %v1501 = vmax.f32 %v1499, 0.0
        %1504 = vst [vmem:[#allocation1] ss:$2 sm:$0xff] %v1500
        %s1505 = scalar_lea.vmem [#allocation1], 16
        %1506 = vst [vmem:[%s1505] ss:$2 sm:$0xff] %v1501
        %v1507 = vld.sshfl [vmem:[#allocation1] sm:$0xff pattern:$0x75316420]
        %v1508 = vld.sshfl [vmem:[#allocation1 + $0x8] sm:$0xff pattern:$0x75316420]
        %v1509 = vld.sshfl [vmem:[#allocation1 + $0x10] sm:$0xff pattern:$0x75316420]
        %v1513 = vpack.c.bf16 %v1507, %v1507
        %v1514 = vpack.c.bf16 %v1508, %v1508
        %v1515 = vpack.c.bf16 %v1509, %v1509
        %s1516 = scalar_lea.vmem %s1, 56
        %v1517 = vld [vmem:[%s1516] sm:$0xf]
        %1521 = vrot.lane.b32.xlu0 %v1513, 108
        %v1522 = vpop.permute.xlu0 %1521
        %1523 = vrot.lane.b32.xlu0 %v1514, 108
        %v1524 = vpop.permute.xlu0 %1523
        %1525 = vrot.lane.b32.xlu0 %v1515, 108
        %v1526 = vpop.permute.xlu0 %1525
        %v1527 = vsel %vm719, %v1522, %v1524
        %v1528 = vsel %vm719, %v1524, %v1526
        %v1530 = vsel %vm299, %v1517, 0
        %v1533 = vsel %vm303, %v1527, 0
        %v1536 = vsel %vm303, %v1528, 0
        %v1539 = vsel %vm303, %v1526, 0
        %1541 = vmatpush.bf16.msra.mxu0 0
        %1542 = vmatpush.bf16.msra.mxu0 0
        %1543 = vmatpush.bf16.msra.mxu0 0
        %1544 = vmatpush.bf16.msra.mxu0 0
        %1545 = vmatpush.bf16.msra.mxu0 0
        %1546 = vmatpush.bf16.msra.mxu0 0
        %1547 = vmatpush.bf16.msra.mxu0 0
        %1548 = vmatpush.bf16.msra.mxu0 %v1533
        %1549 = vmatmul.bf16.gmra.mxu0 %v1530
        %v1550 = vpop.f32.mrf.mxu0
        %v1551 = vadd.f32 0.0, %v1550
        %v1552 = vpop.f32.mrf.mxu0
        %1553 = vdwg.mxu0
        %1554 = vmatpush.bf16.msra.mxu0 0
        %1555 = vmatpush.bf16.msra.mxu0 0
        %1556 = vmatpush.bf16.msra.mxu0 0
        %1557 = vmatpush.bf16.msra.mxu0 0
        %1558 = vmatpush.bf16.msra.mxu0 0
        %1559 = vmatpush.bf16.msra.mxu0 0
        %1560 = vmatpush.bf16.msra.mxu0 0
        %1561 = vmatpush.bf16.msra.mxu0 %v1536
        %1562 = vmatmul.bf16.gmra.mxu0 %v1530
        %v1563 = vpop.f32.mrf.mxu0
        %v1564 = vadd.f32 0.0, %v1563
        %v1565 = vpop.f32.mrf.mxu0
        %1566 = vdwg.mxu0
        %1567 = vmatpush.bf16.msra.mxu0 0
        %1568 = vmatpush.bf16.msra.mxu0 0
        %1569 = vmatpush.bf16.msra.mxu0 0
        %1570 = vmatpush.bf16.msra.mxu0 0
        %1571 = vmatpush.bf16.msra.mxu0 0
        %1572 = vmatpush.bf16.msra.mxu0 0
        %1573 = vmatpush.bf16.msra.mxu0 0
        %1574 = vmatpush.bf16.msra.mxu0 %v1539
        %1575 = vmatmul.bf16.gmra.mxu0 %v1530
        %v1576 = vpop.f32.mrf.mxu0
        %v1577 = vadd.f32 0.0, %v1576
        %v1578 = vpop.f32.mrf.mxu0
        %1579 = vdwg.mxu0
        %v1580 = vadd.f32 %v1468, %v1551
        %v1581 = vadd.f32 %v1481, %v1564
        %v1582 = vadd.f32 %v1494, %v1577
        %v1583 = vld [vmem:[%s235] sm:$0x3f]
        %v1584 = vunpack.c.l.bf16 %v1583
        %v1585 = vunpack.c.h.bf16 %v1583
        %v1586 = vmax.f32 %v1584, 0.0
        %v1587 = vmax.f32 %v1585, 0.0
        %1590 = vst [vmem:[#allocation1] ss:$2 sm:$0xff] %v1586
        %s1591 = scalar_lea.vmem [#allocation1], 16
        %1592 = vst [vmem:[%s1591] ss:$2 sm:$0xff] %v1587
        %v1593 = vld.sshfl [vmem:[#allocation1] sm:$0xff pattern:$0x75316420]
        %v1594 = vld.sshfl [vmem:[#allocation1 + $0x8] sm:$0xff pattern:$0x75316420]
        %v1595 = vld.sshfl [vmem:[#allocation1 + $0x10] sm:$0xff pattern:$0x75316420]
        %v1599 = vpack.c.bf16 %v1593, %v1593
        %v1600 = vpack.c.bf16 %v1594, %v1594
        %v1601 = vpack.c.bf16 %v1595, %v1595
        %s1602 = scalar_lea.vmem %s1, 60
        %v1603 = vld [vmem:[%s1602] sm:$0xf]
        %1607 = vrot.lane.b32.xlu0 %v1599, 109
        %v1608 = vpop.permute.xlu0 %1607
        %1609 = vrot.lane.b32.xlu0 %v1600, 109
        %v1610 = vpop.permute.xlu0 %1609
        %1611 = vrot.lane.b32.xlu0 %v1601, 109
        %v1612 = vpop.permute.xlu0 %1611
        %v1613 = vsel %vm361, %v1608, %v1610
        %v1614 = vsel %vm361, %v1610, %v1612
        %v1616 = vsel %vm299, %v1603, 0
        %v1619 = vsel %vm303, %v1613, 0
        %v1622 = vsel %vm303, %v1614, 0
        %v1625 = vsel %vm303, %v1612, 0
        %1627 = vmatpush.bf16.msra.mxu0 0
        %1628 = vmatpush.bf16.msra.mxu0 0
        %1629 = vmatpush.bf16.msra.mxu0 0
        %1630 = vmatpush.bf16.msra.mxu0 0
        %1631 = vmatpush.bf16.msra.mxu0 0
        %1632 = vmatpush.bf16.msra.mxu0 0
        %1633 = vmatpush.bf16.msra.mxu0 0
        %1634 = vmatpush.bf16.msra.mxu0 %v1619
        %1635 = vmatmul.bf16.gmra.mxu0 %v1616
        %v1636 = vpop.f32.mrf.mxu0
        %v1637 = vadd.f32 0.0, %v1636
        %v1638 = vpop.f32.mrf.mxu0
        %1639 = vdwg.mxu0
        %1640 = vmatpush.bf16.msra.mxu0 0
        %1641 = vmatpush.bf16.msra.mxu0 0
        %1642 = vmatpush.bf16.msra.mxu0 0
        %1643 = vmatpush.bf16.msra.mxu0 0
        %1644 = vmatpush.bf16.msra.mxu0 0
        %1645 = vmatpush.bf16.msra.mxu0 0
        %1646 = vmatpush.bf16.msra.mxu0 0
        %1647 = vmatpush.bf16.msra.mxu0 %v1622
        %1648 = vmatmul.bf16.gmra.mxu0 %v1616
        %v1649 = vpop.f32.mrf.mxu0
        %v1650 = vadd.f32 0.0, %v1649
        %v1651 = vpop.f32.mrf.mxu0
        %1652 = vdwg.mxu0
        %1653 = vmatpush.bf16.msra.mxu0 0
        %1654 = vmatpush.bf16.msra.mxu0 0
        %1655 = vmatpush.bf16.msra.mxu0 0
        %1656 = vmatpush.bf16.msra.mxu0 0
        %1657 = vmatpush.bf16.msra.mxu0 0
        %1658 = vmatpush.bf16.msra.mxu0 0
        %1659 = vmatpush.bf16.msra.mxu0 0
        %1660 = vmatpush.bf16.msra.mxu0 %v1625
        %1661 = vmatmul.bf16.gmra.mxu0 %v1616
        %v1662 = vpop.f32.mrf.mxu0
        %v1663 = vadd.f32 0.0, %v1662
        %v1664 = vpop.f32.mrf.mxu0
        %1665 = vdwg.mxu0
        %v1666 = vadd.f32 %v1580, %v1637
        %v1667 = vadd.f32 %v1581, %v1650
        %v1668 = vadd.f32 %v1582, %v1663
        %s1669 = scalar_lea.vmem %s218, 72 [#allocation2]
        %1670 = vst [vmem:[%s1669] sm:$0xff] %v1666
        %1671 = vst [vmem:[%s1669 + $0x8] sm:$0xff] %v1667
        %1672 = vst.msk [vmem:[%s1669 + $0x10] sm:$0xff] %vm579, %v1668
        %v1673 = vmul.f32 %v1666, %v582
        %v1674 = vmul.f32 %v1667, %v583
        %v1675 = vmul.f32 %v1668, %v584
        %v1676 = vadd.f32 %v1673, %v1674
        %v1677 = vsel %vm579, %v1675, 0.0
        %v1678 = vadd.f32 %v1676, %v1677
        %1679 = vadd.xlane.f32.xlu0 %v1678
        %v1680 = vpop.xlane.xlu0 %1679
        %v1681 = vadd.f32 %v1320, %v1680
        %v1682 = vmul.f32 %v1673, %v1666
        %v1683 = vmul.f32 %v1674, %v1667
        %v1684 = vmul.f32 %v1675, %v1668
        %v1685 = vadd.f32 %v1682, %v1683
        %v1686 = vsel %vm579, %v1684, 0.0
        %v1687 = vadd.f32 %v1685, %v1686
        %1688 = vadd.xlane.f32.xlu0 %v1687
        %v1689 = vpop.xlane.xlu0 %1688
        %v1690 = vadd.f32 %v1329, %v1689
        %vm1691 = vcmask 7168
        %1692 = vst.msk [vmem:[%s239] sm:$0xff] %vm1691, %v1681
        %1693 = vst.msk [vmem:[%s243] sm:$0xff] %vm1691, %v1690
        %s1694 = sand.u32 %s96, 1
        %s1695 = scalar_lea.sflag [#allocation3], %s1694
        %s1696 = sand.u32 %s96, 1
        %s1697 = smul.addr %s1696, 96
        %s1698 = scalar_lea.vmem [#allocation2], %s1697
        %p1699 = scmp.lt.s32.totalorder %s20, 1
        %s1700 = scalar_select %p1699, %s20, 1
        %s1701 = smul.addr %s1700, 8
        %s1702 = scalar_lea.vmem %s4, %s1701
        %p1703 = scmp.lt.s32.totalorder %s20, 1
        %s1704 = scalar_select %p1703, %s20, 1
        %s1705 = smul.addr %s1704, 8
        %s1706 = scalar_lea.vmem %s5, %s1705
        // Predicated region
        $region33: #{tpu_custom_call.1} parent=31 // pred_check
          %p1707 = pneg %p106
        $region34: #{tpu_custom_call.1} parent=31 // pred_check_branch
          %1709 = sbr.rel (%p1707) target = $region36
        $region35: #{tpu_custom_call.1} parent=31 // pred_region
          %1711 = vsyncadd %s1695, 0
          %s1712 = smul.addr %s20, 12
          %s1713 = smul.addr %s1712, 8
          %s1714 = scalar_lea.hbm %s3, %s1713
          %s1715 = sshll.u32 %s1698, 4
          %s1716 = int_to_ptr.vmem [resolvable:$true] %s1715
          %s1717 = sshll.u32 %s1714, 4
          %s1718 = int_to_ptr.hbm [resolvable:$true] %s1717
          %1723 = dma.vmem_to_hbm [thread:$0]  %s1716, 1536, %s1718, %s1695, 384, 384, 24
        $region36: #{tpu_custom_call.1} parent=31 // pred_fallthru
          _
        // Predicated region
        $region37: #{tpu_custom_call.1} parent=31 // pred_check
          %p1724 = pneg %p132
        $region38: #{tpu_custom_call.1} parent=31 // pred_check_branch
          %1726 = sbr.rel (%p1724) target = $region40
        $region39: #{tpu_custom_call.1} parent=31 // pred_region
          _
        $region40: #{tpu_custom_call.1} parent=31 // pred_fallthru
          _
        // Predicated region
        $region41: #{tpu_custom_call.1} parent=31 // pred_check
          %p1727 = pneg %p158
        $region42: #{tpu_custom_call.1} parent=31 // pred_check_branch
          %1729 = sbr.rel (%p1727) target = $region44
        $region43: #{tpu_custom_call.1} parent=31 // pred_region
          _
        $region44: #{tpu_custom_call.1} parent=31 // pred_fallthru
          _
      $region32: #{tpu_custom_call.1} parent=5 // pred_fallthru
        _
      %p1730 = scmp.le.s32.totalorder 2, %s15
      // Predicated region
      $region45: #{tpu_custom_call.1} parent=5 // pred_check
        %p1731 = pneg %p1730
      $region46: #{tpu_custom_call.1} parent=5 // pred_check_branch
        %1733 = sbr.rel (%p1731) target = $region48
      $region47: #{tpu_custom_call.1} parent=5 // pred_region
        %s1734 = ssub.s32 %s15, 2
        // Predicated region
        $region49: #{tpu_custom_call.1} parent=47 // pred_check
          %p1735 = pneg %p112
        $region50: #{tpu_custom_call.1} parent=47 // pred_check_branch
          %1737 = sbr.rel (%p1735) target = $region52
        $region51: #{tpu_custom_call.1} parent=47 // pred_region
          %s1738 = sand.u32 %s97, 1
          %s1739 = scalar_lea.sflag [#allocation3], %s1738
          %s1740 = sand.u32 %s97, 1
          %s1741 = smul.addr %s1740, 96
          %s1742 = scalar_lea.vmem [#allocation2], %s1741
          %1744 = dma.done %s1739, 1536
        $region52: #{tpu_custom_call.1} parent=47 // pred_fallthru
          _
        // Predicated region
        $region53: #{tpu_custom_call.1} parent=47 // pred_check
          %p1745 = pneg %p138
        $region54: #{tpu_custom_call.1} parent=47 // pred_check_branch
          %1747 = sbr.rel (%p1745) target = $region56
        $region55: #{tpu_custom_call.1} parent=47 // pred_region
          %p1748 = scmp.lt.s32.totalorder %s21, 1
          %s1749 = scalar_select %p1748, %s21, 1
          %s1750 = smul.addr %s1749, 8
          %s1751 = scalar_lea.vmem %s4, %s1750
        $region56: #{tpu_custom_call.1} parent=47 // pred_fallthru
          _
        // Predicated region
        $region57: #{tpu_custom_call.1} parent=47 // pred_check
          %p1752 = pneg %p164
        $region58: #{tpu_custom_call.1} parent=47 // pred_check_branch
          %1754 = sbr.rel (%p1752) target = $region60
        $region59: #{tpu_custom_call.1} parent=47 // pred_region
          %p1755 = scmp.lt.s32.totalorder %s21, 1
          %s1756 = scalar_select %p1755, %s21, 1
          %s1757 = smul.addr %s1756, 8
          %s1758 = scalar_lea.vmem %s5, %s1757
        $region60: #{tpu_custom_call.1} parent=47 // pred_fallthru
          _
      $region48: #{tpu_custom_call.1} parent=5 // pred_fallthru
        _
    $region6: #{tpu_custom_call.1} parent=1 // loop_footer
      %s19 = sadd.s32 1, %s15
    $region7: #{tpu_custom_call.1} parent=1 // loop_footer_branch
      %14 = sbr.rel target = $region3
    $region8: #{tpu_custom_call.1} parent=1 // loop_exit
      _
    %1759 = vsyncpa [#allocation3], 1
    %s1760 = scalar_lea.sflag [#allocation3], 1
    %1761 = vsyncpa %s1760, 1

</llo_original>
